<compile_context>
chip_gen: v7x
topology: tpu7x:2x2x1
jax: 0.10.0
libtpu: 0.0.40
codegen_flags: <defaults>
</compile_context>

<pallas_src>
import functools

import jax
import jax.numpy as jnp
from jax.experimental import pallas as pl
from jax.experimental.pallas import tpu as pltpu


def _tpu_generation():
    """Best-effort TPU generation (e.g. 5, 6, 7) from device_kind; None if unknown."""
    try:
        kind = jax.devices()[0].device_kind.lower()
    except Exception:
        return None
    if "v7" in kind or "7x" in kind:
        return 7
    for g in (6, 5, 4, 3, 2):
        if f"v{g}" in kind:
            return g
    return None


def _largest_divisor_leq(n, k):
    """Largest divisor of n that is <= k (>= 1)."""
    k = max(1, min(n, k))
    for d in range(k, 0, -1):
        if n % d == 0:
            return d
    return 1


def _block_bytes(block_b, seq_len, d_pad, att_dim):
    """Approximate per-grid-step VMEM footprint in bytes."""
    bs = block_b * seq_len
    x_in = 2 * bs * d_pad * 4                       # pipelined input, double-buffered
    out = 2 * bs * d_pad * 4                        # pipelined output, double-buffered
    scratch = bs * d_pad * 4 + bs * 2 * att_dim * 4  # c_ref + p_ref scratch
    weights = (d_pad * 2 * att_dim + d_pad * d_pad + d_pad) * 4  # single-buffered consts
    return x_in + out + scratch + weights


def _const_spec(shape):
    """BlockSpec for grid-invariant inputs (weights / bias): identical block at
    every grid step, single-buffered so constants don't pay for a 2nd copy."""
    index_map = lambda i: (0,) * len(shape)
    try:
        return pl.BlockSpec(shape, index_map, pipeline_mode=pl.Buffered(1))
    except TypeError:  # BlockSpec without pipeline_mode support
        return pl.BlockSpec(shape, index_map)


def _additive_attn_kernel(x_ref, wcat_ref, v_ref, wp_ref, bp_ref,
                          o_ref, c_ref, p_ref,
                          *, seq_len, att_dim, n_batch, compute_dtype, unroll):
    """One grid step processes `n_batch` batch rows (n_batch*S flattened tokens).

    x_ref   : (n_batch*S, Dp)  tokens for this block (Dp = lane-padded D)
    wcat_ref: (Dp, 2A)         [W ; Wtilde] fused, pre-transposed to (in, out)
    v_ref   : (A,)    SMEM     attention vector
    wp_ref  : (Dp, Dp)         proj weight, pre-transposed to (in, out)
    bp_ref  : (1, Dp)          proj bias
    o_ref   : (n_batch*S, Dp)  output tokens
    c_ref   : (n_batch*S, Dp)  VMEM scratch: context vectors
    p_ref   : (n_batch*S, 2A)  VMEM scratch: fused projections [W1x ; W2x]
    """
    S, A = seq_len, att_dim
    f32 = jnp.float32
    cdt = compute_dtype

    # 1) Fused projection for the whole block: one MXU matmul computes both
    #    W x and Wtilde x.  x is NOT kept live as a value across the batch
    #    loop -- it is re-read from the resident VMEM block where needed.
    p_ref[...] = jnp.dot(x_ref[...].astype(cdt), wcat_ref[...].astype(cdt),
                         preferred_element_type=f32)            # (BS, 2A) f32

    # Hoisted out of the batch loop: SMEM scalar reads of v (A slds, once).
    v_vals = [v_ref[a] for a in range(A)]

    # Diagonal mask, built once and reused for every batch row.
    ri = jax.lax.broadcasted_iota(jnp.int32, (S, S), 0)
    ci = jax.lax.broadcasted_iota(jnp.int32, (S, S), 1)
    diag = ri == ci
    neg_inf = jnp.float32(-jnp.inf)

    def batch_body(lo):
        pb = p_ref[pl.ds(lo, S), :]                             # (S, 2A) f32
        xb = x_ref[pl.ds(lo, S), :]                             # (S, Dp)
        w1t = pb[:, :A].T.astype(cdt)                           # (A, S): keys j on lanes
        w2 = pb[:, A:].astype(cdt)                              # (S, A): queries i on sublanes

        # s[i, j] = sum_a v[a] * tanh(w1x[j, a] + w2x[i, a])
        # Unrolled A-loop on lane-dense (S, S) tiles; the (S, S, A) intermediate
        # never exists.  add/tanh run in compute_dtype (bf16 on v6e/v7x), the
        # multiply by the f32 scalar v[a] promotes each term to f32, so the
        # score accumulation stays f32.
        s = jnp.zeros((S, S), f32)
        for a in range(A):
            row = w1t[a:a + 1, :]                               # (1, S) -> broadcast over i
            col = w2[:, a:a + 1]                                # (S, 1) -> broadcast over j
            s = s + v_vals[a] * jnp.tanh(col + row)

        # Mask the diagonal, softmax over the key axis (all f32 statistics).
        s = jnp.where(diag, neg_inf, s)
        m = jnp.max(s, axis=-1, keepdims=True)
        e = jnp.exp(s - m)
        denom = jnp.sum(e, axis=-1, keepdims=True)
        attn = e * pl.reciprocal(denom, approx=False)           # exact for 1e-4 check

        # Context vectors for this batch row (f32 accumulation on the MXU).
        c_ref[pl.ds(lo, S), :] = jnp.dot(attn.astype(cdt), xb.astype(cdt),
                                         preferred_element_type=f32)

    if unroll:
        # Tiny n_batch: static unroll, static offsets.
        for b in range(n_batch):
            batch_body(b * S)
    else:
        # Large blocks: fori_loop bounds live ranges / code size.
        def loop_body(b, carry):
            batch_body(pl.multiple_of(b * S, S))
            return carry
        jax.lax.fori_loop(0, n_batch, loop_body, 0)

    # 2) Single projection matmul over the whole block (M = n_batch*S), then
    #    ReLU + residual.  Dropout is identity (eval mode / drop_prob = 0.0).
    proj = jnp.dot(c_ref[...].astype(cdt), wp_ref[...].astype(cdt),
                   preferred_element_type=f32)
    proj = jnp.maximum(proj + bp_ref[...].astype(f32), 0.0)
    # Re-read x from the resident VMEM block for the residual (cheap vld;
    # avoids holding a (BS, Dp) value live across the whole batch loop).
    o_ref[...] = (x_ref[...].astype(f32) + proj).astype(o_ref.dtype)


def additive_self_attention(x, w_W, w_Wtilde, w_v, w_proj, b_proj,
                            *, block_b=None, compute_dtype=None, pad_lanes=True):
    """x: (B, S, D).  Weights in PyTorch layout:
       w_W, w_Wtilde: (A, D); w_v: (1, A); w_proj: (D, D); b_proj: (D,)."""
    B, S, D = x.shape
    A = w_W.shape[0]
    gen = _tpu_generation()

    # bf16 score loop / matmuls on v6e & v7x (bf16 VPU/EUP/MXU); f32 elsewhere.
    if compute_dtype is None:
        compute_dtype = jnp.bfloat16 if (gen is not None and gen >= 6) else jnp.float32

    # Lane-dense output: pad the model dim to a multiple of 128 so every store
    # is an unmasked vst (weights/bias are zero-padded consistently; padded
    # output columns are exactly zero and sliced off in the wrapper).
    D_pad = ((D + 127) // 128) * 128 if (pad_lanes and D % 128 != 0) else D

    # Per-generation VMEM budget (v7x: 64 MiB/TC physical; v5e/v6e: 128 MiB).
    budget = {7: 56, 6: 100, 5: 100}.get(gen, 60) * (1 << 20)

    # block_b: on v7x give the "parallel" grid axis >= 2 steps so both TCs get
    # work; on v5e/v6e a single fat step minimizes per-step overhead.
    if block_b is None:
        if gen == 7 and B >= 2:
            block_b = _largest_divisor_leq(B, B // 2)
        else:
            block_b = B
    assert B % block_b == 0
    # Shrink block_b (to a divisor of B) until the per-block footprint fits.
    while block_b > 1 and _block_bytes(block_b, S, D_pad, A) > budget:
        block_b = _largest_divisor_leq(B, block_b - 1)
    nb = B // block_b
    # (8,128) rule: a partial block's sublane dim must be a multiple of 8.
    if nb > 1 and (block_b * S) % 8 != 0:
        block_b, nb = B, 1
    bs = block_b * S
    footprint = _block_bytes(block_b, S, D_pad, A)
    vmem_limit = int(min(budget, max(2 * footprint + (4 << 20), 16 << 20)))

    # Wrapper-side layout plumbing (cheap XLA ops, outside the kernel).
    x_flat = jnp.asarray(x).reshape(B * S, D)
    wcat_t = jnp.concatenate([jnp.asarray(w_W), jnp.asarray(w_Wtilde)],
                             axis=0).T                              # (D, 2A)
    wp_t = jnp.asarray(w_proj).T                                    # (D, D)
    bp = jnp.asarray(b_proj).reshape(1, D)
    v1 = jnp.asarray(w_v).reshape(A).astype(jnp.float32)            # (A,) -> SMEM
    if D_pad != D:
        pad = D_pad - D
        x_flat = jnp.pad(x_flat, ((0, 0), (0, pad)))
        wcat_t = jnp.pad(wcat_t, ((0, pad), (0, 0)))
        wp_t = jnp.pad(wp_t, ((0, pad), (0, pad)))
        bp = jnp.pad(bp, ((0, 0), (0, pad)))

    kernel = functools.partial(_additive_attn_kernel,
                               seq_len=S, att_dim=A, n_batch=block_b,
                               compute_dtype=compute_dtype,
                               unroll=block_b <= 4)

    out_flat = pl.pallas_call(
        kernel,
        out_shape=jax.ShapeDtypeStruct((B * S, D_pad), x.dtype),
        grid_spec=pltpu.PrefetchScalarGridSpec(
            num_scalar_prefetch=0,
            grid=(nb,),
            in_specs=[
                pl.BlockSpec((bs, D_pad), lambda i: (i, 0)),         # x tokens (pipelined)
                _const_spec((D_pad, 2 * A)),                         # fused W/Wtilde (1-buffered)
                pl.BlockSpec(memory_space=pltpu.MemorySpace.SMEM),   # v (scalars)
                _const_spec((D_pad, D_pad)),                         # proj weight (1-buffered)
                _const_spec((1, D_pad)),                             # proj bias (1-buffered)
            ],
            out_specs=pl.BlockSpec((bs, D_pad), lambda i: (i, 0)),
            scratch_shapes=[pltpu.VMEM((bs, D_pad), jnp.float32),    # c_ref
                            pltpu.VMEM((bs, 2 * A), jnp.float32)],   # p_ref
        ),
        compiler_params=pltpu.CompilerParams(
            dimension_semantics=("parallel",),
            vmem_limit_bytes=vmem_limit,
        ),
    )(x_flat, wcat_t, v1, wp_t, bp)

    if D_pad != D:
        out_flat = out_flat[:, :D]
    return out_flat.reshape(B, S, D)


def reference(x, w_W, w_Wtilde, w_v, w_proj, b_proj):
    """Pure-JAX reference mirroring calc_additive_attention + forward."""
    w1x = jnp.einsum('bsd,ad->bsa', x, w_W)
    w2x = jnp.einsum('bsd,ad->bsa', x, w_Wtilde)
    t = jnp.tanh(w1x[:, None, :, :] + w2x[:, :, None, :])   # (B, S, S, A)
    s = jnp.einsum('bija,a->bij', t, w_v[0])
    S = x.shape[1]
    eye = jnp.eye(S, dtype=bool)
    s = jnp.where(eye[None], -jnp.inf, s)
    a = jax.nn.softmax(s, axis=-1)
    c = jnp.einsum('bij,bjd->bid', a, x)
    proj = jnp.maximum(jnp.einsum('bid,ed->bie', c, w_proj) + b_proj, 0.0)
    return x + proj


if __name__ == "__main__":
    B, S, D, A = 2, 8, 32, 16       # batch, seq_len, input_size, att_dim

    key = jax.random.PRNGKey(0)
    kx, kw, kwt, kv, kp, kb = jax.random.split(key, 6)

    x = jax.random.normal(kx, (B, S, D), dtype=jnp.float32)
    w_W = jax.random.normal(kw, (A, D), dtype=jnp.float32) * 0.1
    w_Wtilde = jax.random.normal(kwt, (A, D), dtype=jnp.float32) * 0.1
    w_v = jax.random.normal(kv, (1, A), dtype=jnp.float32) * 0.1
    w_proj = jax.random.normal(kp, (D, D), dtype=jnp.float32) * 0.1
    b_proj = jax.random.normal(kb, (D,), dtype=jnp.float32) * 0.1

    ref = reference(x, w_W, w_Wtilde, w_v, w_proj, b_proj)

    # Exact f32 path (all generations): strict reference check.
    out = additive_self_attention(x, w_W, w_Wtilde, w_v, w_proj, b_proj,
                                  compute_dtype=jnp.float32)
    out = jax.block_until_ready(out)
    assert out.shape == (B, S, D)
    err = jnp.max(jnp.abs(out - ref))
    assert jnp.allclose(out, ref, atol=1e-4, rtol=1e-4), f"f32 max err {err}"

    # bf16 score-loop / matmul path (v6e / v7x only; v5e has no bf16 VPU/EUP).
    # Softmax statistics and all accumulation stay f32, so a looser tolerance
    # suffices (per review, 1e-4 cannot hold for the bf16 tanh/score path).
    gen = _tpu_generation()
    if gen is not None and gen >= 6:
        out_bf16 = jax.block_until_ready(
            additive_self_attention(x, w_W, w_Wtilde, w_v, w_proj, b_proj,
                                    compute_dtype=jnp.bfloat16))
        err_bf16 = jnp.max(jnp.abs(out_bf16 - ref))
        assert jnp.allclose(out_bf16, ref, atol=1e-1, rtol=2e-2), \
            f"bf16 max err {err_bf16}"

    print("KERNEL_OK")
</pallas_src>

<mosaic_0001>
module attributes {stable_mosaic.version = 11 : i64} {
  func.func @_additive_attn_kernel(%arg0: i32, %arg1: memref<16x128xf32, #tpu.memory_space<vmem>>, %arg2: memref<128x32xf32, #tpu.memory_space<vmem>>, %arg3: memref<16xf32, #tpu.memory_space<smem>>, %arg4: memref<128x128xf32, #tpu.memory_space<vmem>>, %arg5: memref<1x128xf32, #tpu.memory_space<vmem>>, %arg6: memref<16x128xf32, #tpu.memory_space<vmem>>, %arg7: memref<16x128xf32, #tpu.memory_space<vmem>>, %arg8: memref<16x32xf32, #tpu.memory_space<vmem>>) attributes {dimension_semantics = [#tpu.dimension_semantics<parallel>], iteration_bounds = array<i64: 1>, scalar_prefetch = 0 : i64, scratch_operands = 2 : i64, tpu.core_type = #tpu.core_type<tc>, window_params = [{transform_indices = @transform_0, window_bounds = array<i64: 16, 128>}, {pipeline_mode = #tpu.pipeline_mode<synchronous>, transform_indices = @transform_1, window_bounds = array<i64: 128, 32>}, {transform_indices = @transform_2, window_bounds = array<i64: 16>}, {pipeline_mode = #tpu.pipeline_mode<synchronous>, transform_indices = @transform_3, window_bounds = array<i64: 128, 128>}, {pipeline_mode = #tpu.pipeline_mode<synchronous>, transform_indices = @transform_4, window_bounds = array<i64: 1, 128>}, {transform_indices = @transform_5, window_bounds = array<i64: 16, 128>}]} {
    %c0 = arith.constant 0 : index
    %c0_0 = arith.constant 0 : index
    %0 = vector.load %arg1[%c0, %c0_0] : memref<16x128xf32, #tpu.memory_space<vmem>>, vector<16x128xf32>
    %c0_1 = arith.constant 0 : index
    %c0_2 = arith.constant 0 : index
    %1 = vector.load %arg2[%c0_1, %c0_2] : memref<128x32xf32, #tpu.memory_space<vmem>>, vector<128x32xf32>
    %cst = arith.constant dense<0.000000e+00> : vector<16x32xf32>
    %2 = tpu.matmul %0, %1, %cst {dimension_numbers = #tpu.dot_dimension_numbers<[1], [0], [0], [1], [0, 0, 1, 1], [], []>} : vector<16x128xf32>, vector<128x32xf32>, vector<16x32xf32> -> vector<16x32xf32>
    %c0_3 = arith.constant 0 : index
    %c0_4 = arith.constant 0 : index
    %3 = vector.load %arg8[%c0_3, %c0_4] : memref<16x32xf32, #tpu.memory_space<vmem>>, vector<16x32xf32>
    tpu.vector_store %arg8[%c0_3, %c0_4], %2 {strides = array<i32>} : memref<16x32xf32, #tpu.memory_space<vmem>>, vector<16x32xf32>,
    %c0_5 = arith.constant 0 : index
    %4 = memref.load %arg3[%c0_5] : memref<16xf32, #tpu.memory_space<smem>>
    %c1 = arith.constant 1 : index
    %5 = memref.load %arg3[%c1] : memref<16xf32, #tpu.memory_space<smem>>
    %c2 = arith.constant 2 : index
    %6 = memref.load %arg3[%c2] : memref<16xf32, #tpu.memory_space<smem>>
    %c3 = arith.constant 3 : index
    %7 = memref.load %arg3[%c3] : memref<16xf32, #tpu.memory_space<smem>>
    %c4 = arith.constant 4 : index
    %8 = memref.load %arg3[%c4] : memref<16xf32, #tpu.memory_space<smem>>
    %c5 = arith.constant 5 : index
    %9 = memref.load %arg3[%c5] : memref<16xf32, #tpu.memory_space<smem>>
    %c6 = arith.constant 6 : index
    %10 = memref.load %arg3[%c6] : memref<16xf32, #tpu.memory_space<smem>>
    %c7 = arith.constant 7 : index
    %11 = memref.load %arg3[%c7] : memref<16xf32, #tpu.memory_space<smem>>
    %c8 = arith.constant 8 : index
    %12 = memref.load %arg3[%c8] : memref<16xf32, #tpu.memory_space<smem>>
    %c9 = arith.constant 9 : index
    %13 = memref.load %arg3[%c9] : memref<16xf32, #tpu.memory_space<smem>>
    %c10 = arith.constant 10 : index
    %14 = memref.load %arg3[%c10] : memref<16xf32, #tpu.memory_space<smem>>
    %c11 = arith.constant 11 : index
    %15 = memref.load %arg3[%c11] : memref<16xf32, #tpu.memory_space<smem>>
    %c12 = arith.constant 12 : index
    %16 = memref.load %arg3[%c12] : memref<16xf32, #tpu.memory_space<smem>>
    %c13 = arith.constant 13 : index
    %17 = memref.load %arg3[%c13] : memref<16xf32, #tpu.memory_space<smem>>
    %c14 = arith.constant 14 : index
    %18 = memref.load %arg3[%c14] : memref<16xf32, #tpu.memory_space<smem>>
    %c15 = arith.constant 15 : index
    %19 = memref.load %arg3[%c15] : memref<16xf32, #tpu.memory_space<smem>>
    %20 = tpu.iota {dimensions = array<i32: 0>} : vector<8x8xi32>
    %21 = tpu.iota {dimensions = array<i32: 1>} : vector<8x8xi32>
    %22 = arith.cmpi eq, %20, %21 : vector<8x8xi32>
    %c0_6 = arith.constant 0 : index
    %c0_7 = arith.constant 0 : index
    %23 = vector.load %arg8[%c0_6, %c0_7] : memref<16x32xf32, #tpu.memory_space<vmem>>, vector<8x32xf32>
    %c0_8 = arith.constant 0 : index
    %c0_9 = arith.constant 0 : index
    %24 = vector.load %arg1[%c0_8, %c0_9] : memref<16x128xf32, #tpu.memory_space<vmem>>, vector<8x128xf32>
    %25 = vector.extract_strided_slice %23 {offsets = [0, 0], sizes = [8, 16], strides = [1, 1]} : vector<8x32xf32> to vector<8x16xf32>
    %26 = tpu.transpose %25, [1, 0] : vector<8x16xf32> -> vector<16x8xf32>
    %27 = vector.extract_strided_slice %23 {offsets = [0, 16], sizes = [8, 16], strides = [1, 1]} : vector<8x32xf32> to vector<8x16xf32>
    %cst_10 = arith.constant 0.000000e+00 : f32
    %28 = vector.broadcast %cst_10 : f32 to vector<8x8xf32>
    %29 = vector.extract_strided_slice %26 {offsets = [0, 0], sizes = [1, 8], strides = [1, 1]} : vector<16x8xf32> to vector<1x8xf32>
    %30 = vector.extract_strided_slice %27 {offsets = [0, 0], sizes = [8, 1], strides = [1, 1]} : vector<8x16xf32> to vector<8x1xf32>
    %31 = vector.broadcast %30 : vector<8x1xf32> to vector<8x8xf32>
    %32 = vector.broadcast %29 : vector<1x8xf32> to vector<8x8xf32>
    %33 = arith.addf %31, %32 : vector<8x8xf32>
    %34 = math.tanh %33 : vector<8x8xf32>
    %35 = vector.broadcast %4 : f32 to vector<8x8xf32>
    %36 = arith.mulf %35, %34 : vector<8x8xf32>
    %37 = arith.addf %28, %36 : vector<8x8xf32>
    %38 = vector.extract_strided_slice %26 {offsets = [1, 0], sizes = [1, 8], strides = [1, 1]} : vector<16x8xf32> to vector<1x8xf32>
    %39 = vector.extract_strided_slice %27 {offsets = [0, 1], sizes = [8, 1], strides = [1, 1]} : vector<8x16xf32> to vector<8x1xf32>
    %40 = vector.broadcast %39 : vector<8x1xf32> to vector<8x8xf32>
    %41 = vector.broadcast %38 : vector<1x8xf32> to vector<8x8xf32>
    %42 = arith.addf %40, %41 : vector<8x8xf32>
    %43 = math.tanh %42 : vector<8x8xf32>
    %44 = vector.broadcast %5 : f32 to vector<8x8xf32>
    %45 = arith.mulf %44, %43 : vector<8x8xf32>
    %46 = arith.addf %37, %45 : vector<8x8xf32>
    %47 = vector.extract_strided_slice %26 {offsets = [2, 0], sizes = [1, 8], strides = [1, 1]} : vector<16x8xf32> to vector<1x8xf32>
    %48 = vector.extract_strided_slice %27 {offsets = [0, 2], sizes = [8, 1], strides = [1, 1]} : vector<8x16xf32> to vector<8x1xf32>
    %49 = vector.broadcast %48 : vector<8x1xf32> to vector<8x8xf32>
    %50 = vector.broadcast %47 : vector<1x8xf32> to vector<8x8xf32>
    %51 = arith.addf %49, %50 : vector<8x8xf32>
    %52 = math.tanh %51 : vector<8x8xf32>
    %53 = vector.broadcast %6 : f32 to vector<8x8xf32>
    %54 = arith.mulf %53, %52 : vector<8x8xf32>
    %55 = arith.addf %46, %54 : vector<8x8xf32>
    %56 = vector.extract_strided_slice %26 {offsets = [3, 0], sizes = [1, 8], strides = [1, 1]} : vector<16x8xf32> to vector<1x8xf32>
    %57 = vector.extract_strided_slice %27 {offsets = [0, 3], sizes = [8, 1], strides = [1, 1]} : vector<8x16xf32> to vector<8x1xf32>
    %58 = vector.broadcast %57 : vector<8x1xf32> to vector<8x8xf32>
    %59 = vector.broadcast %56 : vector<1x8xf32> to vector<8x8xf32>
    %60 = arith.addf %58, %59 : vector<8x8xf32>
    %61 = math.tanh %60 : vector<8x8xf32>
    %62 = vector.broadcast %7 : f32 to vector<8x8xf32>
    %63 = arith.mulf %62, %61 : vector<8x8xf32>
    %64 = arith.addf %55, %63 : vector<8x8xf32>
    %65 = vector.extract_strided_slice %26 {offsets = [4, 0], sizes = [1, 8], strides = [1, 1]} : vector<16x8xf32> to vector<1x8xf32>
    %66 = vector.extract_strided_slice %27 {offsets = [0, 4], sizes = [8, 1], strides = [1, 1]} : vector<8x16xf32> to vector<8x1xf32>
    %67 = vector.broadcast %66 : vector<8x1xf32> to vector<8x8xf32>
    %68 = vector.broadcast %65 : vector<1x8xf32> to vector<8x8xf32>
    %69 = arith.addf %67, %68 : vector<8x8xf32>
    %70 = math.tanh %69 : vector<8x8xf32>
    %71 = vector.broadcast %8 : f32 to vector<8x8xf32>
    %72 = arith.mulf %71, %70 : vector<8x8xf32>
    %73 = arith.addf %64, %72 : vector<8x8xf32>
    %74 = vector.extract_strided_slice %26 {offsets = [5, 0], sizes = [1, 8], strides = [1, 1]} : vector<16x8xf32> to vector<1x8xf32>
    %75 = vector.extract_strided_slice %27 {offsets = [0, 5], sizes = [8, 1], strides = [1, 1]} : vector<8x16xf32> to vector<8x1xf32>
    %76 = vector.broadcast %75 : vector<8x1xf32> to vector<8x8xf32>
    %77 = vector.broadcast %74 : vector<1x8xf32> to vector<8x8xf32>
    %78 = arith.addf %76, %77 : vector<8x8xf32>
    %79 = math.tanh %78 : vector<8x8xf32>
    %80 = vector.broadcast %9 : f32 to vector<8x8xf32>
    %81 = arith.mulf %80, %79 : vector<8x8xf32>
    %82 = arith.addf %73, %81 : vector<8x8xf32>
    %83 = vector.extract_strided_slice %26 {offsets = [6, 0], sizes = [1, 8], strides = [1, 1]} : vector<16x8xf32> to vector<1x8xf32>
    %84 = vector.extract_strided_slice %27 {offsets = [0, 6], sizes = [8, 1], strides = [1, 1]} : vector<8x16xf32> to vector<8x1xf32>
    %85 = vector.broadcast %84 : vector<8x1xf32> to vector<8x8xf32>
    %86 = vector.broadcast %83 : vector<1x8xf32> to vector<8x8xf32>
    %87 = arith.addf %85, %86 : vector<8x8xf32>
    %88 = math.tanh %87 : vector<8x8xf32>
    %89 = vector.broadcast %10 : f32 to vector<8x8xf32>
    %90 = arith.mulf %89, %88 : vector<8x8xf32>
    %91 = arith.addf %82, %90 : vector<8x8xf32>
    %92 = vector.extract_strided_slice %26 {offsets = [7, 0], sizes = [1, 8], strides = [1, 1]} : vector<16x8xf32> to vector<1x8xf32>
    %93 = vector.extract_strided_slice %27 {offsets = [0, 7], sizes = [8, 1], strides = [1, 1]} : vector<8x16xf32> to vector<8x1xf32>
    %94 = vector.broadcast %93 : vector<8x1xf32> to vector<8x8xf32>
    %95 = vector.broadcast %92 : vector<1x8xf32> to vector<8x8xf32>
    %96 = arith.addf %94, %95 : vector<8x8xf32>
    %97 = math.tanh %96 : vector<8x8xf32>
    %98 = vector.broadcast %11 : f32 to vector<8x8xf32>
    %99 = arith.mulf %98, %97 : vector<8x8xf32>
    %100 = arith.addf %91, %99 : vector<8x8xf32>
    %101 = vector.extract_strided_slice %26 {offsets = [8, 0], sizes = [1, 8], strides = [1, 1]} : vector<16x8xf32> to vector<1x8xf32>
    %102 = vector.extract_strided_slice %27 {offsets = [0, 8], sizes = [8, 1], strides = [1, 1]} : vector<8x16xf32> to vector<8x1xf32>
    %103 = vector.broadcast %102 : vector<8x1xf32> to vector<8x8xf32>
    %104 = vector.broadcast %101 : vector<1x8xf32> to vector<8x8xf32>
    %105 = arith.addf %103, %104 : vector<8x8xf32>
    %106 = math.tanh %105 : vector<8x8xf32>
    %107 = vector.broadcast %12 : f32 to vector<8x8xf32>
    %108 = arith.mulf %107, %106 : vector<8x8xf32>
    %109 = arith.addf %100, %108 : vector<8x8xf32>
    %110 = vector.extract_strided_slice %26 {offsets = [9, 0], sizes = [1, 8], strides = [1, 1]} : vector<16x8xf32> to vector<1x8xf32>
    %111 = vector.extract_strided_slice %27 {offsets = [0, 9], sizes = [8, 1], strides = [1, 1]} : vector<8x16xf32> to vector<8x1xf32>
    %112 = vector.broadcast %111 : vector<8x1xf32> to vector<8x8xf32>
    %113 = vector.broadcast %110 : vector<1x8xf32> to vector<8x8xf32>
    %114 = arith.addf %112, %113 : vector<8x8xf32>
    %115 = math.tanh %114 : vector<8x8xf32>
    %116 = vector.broadcast %13 : f32 to vector<8x8xf32>
    %117 = arith.mulf %116, %115 : vector<8x8xf32>
    %118 = arith.addf %109, %117 : vector<8x8xf32>
    %119 = vector.extract_strided_slice %26 {offsets = [10, 0], sizes = [1, 8], strides = [1, 1]} : vector<16x8xf32> to vector<1x8xf32>
    %120 = vector.extract_strided_slice %27 {offsets = [0, 10], sizes = [8, 1], strides = [1, 1]} : vector<8x16xf32> to vector<8x1xf32>
    %121 = vector.broadcast %120 : vector<8x1xf32> to vector<8x8xf32>
    %122 = vector.broadcast %119 : vector<1x8xf32> to vector<8x8xf32>
    %123 = arith.addf %121, %122 : vector<8x8xf32>
    %124 = math.tanh %123 : vector<8x8xf32>
    %125 = vector.broadcast %14 : f32 to vector<8x8xf32>
    %126 = arith.mulf %125, %124 : vector<8x8xf32>
    %127 = arith.addf %118, %126 : vector<8x8xf32>
    %128 = vector.extract_strided_slice %26 {offsets = [11, 0], sizes = [1, 8], strides = [1, 1]} : vector<16x8xf32> to vector<1x8xf32>
    %129 = vector.extract_strided_slice %27 {offsets = [0, 11], sizes = [8, 1], strides = [1, 1]} : vector<8x16xf32> to vector<8x1xf32>
    %130 = vector.broadcast %129 : vector<8x1xf32> to vector<8x8xf32>
    %131 = vector.broadcast %128 : vector<1x8xf32> to vector<8x8xf32>
    %132 = arith.addf %130, %131 : vector<8x8xf32>
    %133 = math.tanh %132 : vector<8x8xf32>
    %134 = vector.broadcast %15 : f32 to vector<8x8xf32>
    %135 = arith.mulf %134, %133 : vector<8x8xf32>
    %136 = arith.addf %127, %135 : vector<8x8xf32>
    %137 = vector.extract_strided_slice %26 {offsets = [12, 0], sizes = [1, 8], strides = [1, 1]} : vector<16x8xf32> to vector<1x8xf32>
    %138 = vector.extract_strided_slice %27 {offsets = [0, 12], sizes = [8, 1], strides = [1, 1]} : vector<8x16xf32> to vector<8x1xf32>
    %139 = vector.broadcast %138 : vector<8x1xf32> to vector<8x8xf32>
    %140 = vector.broadcast %137 : vector<1x8xf32> to vector<8x8xf32>
    %141 = arith.addf %139, %140 : vector<8x8xf32>
    %142 = math.tanh %141 : vector<8x8xf32>
    %143 = vector.broadcast %16 : f32 to vector<8x8xf32>
    %144 = arith.mulf %143, %142 : vector<8x8xf32>
    %145 = arith.addf %136, %144 : vector<8x8xf32>
    %146 = vector.extract_strided_slice %26 {offsets = [13, 0], sizes = [1, 8], strides = [1, 1]} : vector<16x8xf32> to vector<1x8xf32>
    %147 = vector.extract_strided_slice %27 {offsets = [0, 13], sizes = [8, 1], strides = [1, 1]} : vector<8x16xf32> to vector<8x1xf32>
    %148 = vector.broadcast %147 : vector<8x1xf32> to vector<8x8xf32>
    %149 = vector.broadcast %146 : vector<1x8xf32> to vector<8x8xf32>
    %150 = arith.addf %148, %149 : vector<8x8xf32>
    %151 = math.tanh %150 : vector<8x8xf32>
    %152 = vector.broadcast %17 : f32 to vector<8x8xf32>
    %153 = arith.mulf %152, %151 : vector<8x8xf32>
    %154 = arith.addf %145, %153 : vector<8x8xf32>
    %155 = vector.extract_strided_slice %26 {offsets = [14, 0], sizes = [1, 8], strides = [1, 1]} : vector<16x8xf32> to vector<1x8xf32>
    %156 = vector.extract_strided_slice %27 {offsets = [0, 14], sizes = [8, 1], strides = [1, 1]} : vector<8x16xf32> to vector<8x1xf32>
    %157 = vector.broadcast %156 : vector<8x1xf32> to vector<8x8xf32>
    %158 = vector.broadcast %155 : vector<1x8xf32> to vector<8x8xf32>
    %159 = arith.addf %157, %158 : vector<8x8xf32>
    %160 = math.tanh %159 : vector<8x8xf32>
    %161 = vector.broadcast %18 : f32 to vector<8x8xf32>
    %162 = arith.mulf %161, %160 : vector<8x8xf32>
    %163 = arith.addf %154, %162 : vector<8x8xf32>
    %164 = vector.extract_strided_slice %26 {offsets = [15, 0], sizes = [1, 8], strides = [1, 1]} : vector<16x8xf32> to vector<1x8xf32>
    %165 = vector.extract_strided_slice %27 {offsets = [0, 15], sizes = [8, 1], strides = [1, 1]} : vector<8x16xf32> to vector<8x1xf32>
    %166 = vector.broadcast %165 : vector<8x1xf32> to vector<8x8xf32>
    %167 = vector.broadcast %164 : vector<1x8xf32> to vector<8x8xf32>
    %168 = arith.addf %166, %167 : vector<8x8xf32>
    %169 = math.tanh %168 : vector<8x8xf32>
    %170 = vector.broadcast %19 : f32 to vector<8x8xf32>
    %171 = arith.mulf %170, %169 : vector<8x8xf32>
    %172 = arith.addf %163, %171 : vector<8x8xf32>
    %cst_11 = arith.constant 0xFF800000 : f32
    %173 = vector.broadcast %cst_11 : f32 to vector<8x8xf32>
    %174 = arith.select %22, %173, %172 : vector<8x8xi1>, vector<8x8xf32>
    %cst_12 = arith.constant dense<0xFF800000> : vector<8xf32>
    %175 = vector.multi_reduction <maximumf>, %174, %cst_12 [1] : vector<8x8xf32> to vector<8xf32>
    %176 = vector.shape_cast %175 : vector<8xf32> to vector<8x1xf32>
    %177 = vector.broadcast %176 : vector<8x1xf32> to vector<8x8xf32>
    %178 = arith.subf %174, %177 : vector<8x8xf32>
    %179 = math.exp %178 : vector<8x8xf32>
    %cst_13 = arith.constant dense<0.000000e+00> : vector<8xf32>
    %180 = vector.multi_reduction <add>, %179, %cst_13 [1] : vector<8x8xf32> to vector<8xf32>
    %181 = vector.shape_cast %180 : vector<8xf32> to vector<8x1xf32>
    %182 = tpu.reciprocal %181 : vector<8x1xf32> -> vector<8x1xf32>
    %183 = vector.broadcast %182 : vector<8x1xf32> to vector<8x8xf32>
    %184 = arith.mulf %179, %183 : vector<8x8xf32>
    %cst_14 = arith.constant dense<0.000000e+00> : vector<8x128xf32>
    %185 = tpu.matmul %184, %24, %cst_14 {dimension_numbers = #tpu.dot_dimension_numbers<[1], [0], [0], [1], [0, 0, 1, 1], [], []>} : vector<8x8xf32>, vector<8x128xf32>, vector<8x128xf32> -> vector<8x128xf32>
    %c0_15 = arith.constant 0 : index
    %c0_16 = arith.constant 0 : index
    %186 = vector.load %arg7[%c0_15, %c0_16] : memref<16x128xf32, #tpu.memory_space<vmem>>, vector<8x128xf32>
    tpu.vector_store %arg7[%c0_15, %c0_16], %185 {strides = array<i32>} : memref<16x128xf32, #tpu.memory_space<vmem>>, vector<8x128xf32>,
    %c8_17 = arith.constant 8 : index
    %c0_18 = arith.constant 0 : index
    %187 = vector.load %arg8[%c8_17, %c0_18] : memref<16x32xf32, #tpu.memory_space<vmem>>, vector<8x32xf32>
    %c8_19 = arith.constant 8 : index
    %c0_20 = arith.constant 0 : index
    %188 = vector.load %arg1[%c8_19, %c0_20] : memref<16x128xf32, #tpu.memory_space<vmem>>, vector<8x128xf32>
    %189 = vector.extract_strided_slice %187 {offsets = [0, 0], sizes = [8, 16], strides = [1, 1]} : vector<8x32xf32> to vector<8x16xf32>
    %190 = tpu.transpose %189, [1, 0] : vector<8x16xf32> -> vector<16x8xf32>
    %191 = vector.extract_strided_slice %187 {offsets = [0, 16], sizes = [8, 16], strides = [1, 1]} : vector<8x32xf32> to vector<8x16xf32>
    %cst_21 = arith.constant 0.000000e+00 : f32
    %192 = vector.broadcast %cst_21 : f32 to vector<8x8xf32>
    %193 = vector.extract_strided_slice %190 {offsets = [0, 0], sizes = [1, 8], strides = [1, 1]} : vector<16x8xf32> to vector<1x8xf32>
    %194 = vector.extract_strided_slice %191 {offsets = [0, 0], sizes = [8, 1], strides = [1, 1]} : vector<8x16xf32> to vector<8x1xf32>
    %195 = vector.broadcast %194 : vector<8x1xf32> to vector<8x8xf32>
    %196 = vector.broadcast %193 : vector<1x8xf32> to vector<8x8xf32>
    %197 = arith.addf %195, %196 : vector<8x8xf32>
    %198 = math.tanh %197 : vector<8x8xf32>
    %199 = vector.broadcast %4 : f32 to vector<8x8xf32>
    %200 = arith.mulf %199, %198 : vector<8x8xf32>
    %201 = arith.addf %192, %200 : vector<8x8xf32>
    %202 = vector.extract_strided_slice %190 {offsets = [1, 0], sizes = [1, 8], strides = [1, 1]} : vector<16x8xf32> to vector<1x8xf32>
    %203 = vector.extract_strided_slice %191 {offsets = [0, 1], sizes = [8, 1], strides = [1, 1]} : vector<8x16xf32> to vector<8x1xf32>
    %204 = vector.broadcast %203 : vector<8x1xf32> to vector<8x8xf32>
    %205 = vector.broadcast %202 : vector<1x8xf32> to vector<8x8xf32>
    %206 = arith.addf %204, %205 : vector<8x8xf32>
    %207 = math.tanh %206 : vector<8x8xf32>
    %208 = vector.broadcast %5 : f32 to vector<8x8xf32>
    %209 = arith.mulf %208, %207 : vector<8x8xf32>
    %210 = arith.addf %201, %209 : vector<8x8xf32>
    %211 = vector.extract_strided_slice %190 {offsets = [2, 0], sizes = [1, 8], strides = [1, 1]} : vector<16x8xf32> to vector<1x8xf32>
    %212 = vector.extract_strided_slice %191 {offsets = [0, 2], sizes = [8, 1], strides = [1, 1]} : vector<8x16xf32> to vector<8x1xf32>
    %213 = vector.broadcast %212 : vector<8x1xf32> to vector<8x8xf32>
    %214 = vector.broadcast %211 : vector<1x8xf32> to vector<8x8xf32>
    %215 = arith.addf %213, %214 : vector<8x8xf32>
    %216 = math.tanh %215 : vector<8x8xf32>
    %217 = vector.broadcast %6 : f32 to vector<8x8xf32>
    %218 = arith.mulf %217, %216 : vector<8x8xf32>
    %219 = arith.addf %210, %218 : vector<8x8xf32>
    %220 = vector.extract_strided_slice %190 {offsets = [3, 0], sizes = [1, 8], strides = [1, 1]} : vector<16x8xf32> to vector<1x8xf32>
    %221 = vector.extract_strided_slice %191 {offsets = [0, 3], sizes = [8, 1], strides = [1, 1]} : vector<8x16xf32> to vector<8x1xf32>
    %222 = vector.broadcast %221 : vector<8x1xf32> to vector<8x8xf32>
    %223 = vector.broadcast %220 : vector<1x8xf32> to vector<8x8xf32>
    %224 = arith.addf %222, %223 : vector<8x8xf32>
    %225 = math.tanh %224 : vector<8x8xf32>
    %226 = vector.broadcast %7 : f32 to vector<8x8xf32>
    %227 = arith.mulf %226, %225 : vector<8x8xf32>
    %228 = arith.addf %219, %227 : vector<8x8xf32>
    %229 = vector.extract_strided_slice %190 {offsets = [4, 0], sizes = [1, 8], strides = [1, 1]} : vector<16x8xf32> to vector<1x8xf32>
    %230 = vector.extract_strided_slice %191 {offsets = [0, 4], sizes = [8, 1], strides = [1, 1]} : vector<8x16xf32> to vector<8x1xf32>
    %231 = vector.broadcast %230 : vector<8x1xf32> to vector<8x8xf32>
    %232 = vector.broadcast %229 : vector<1x8xf32> to vector<8x8xf32>
    %233 = arith.addf %231, %232 : vector<8x8xf32>
    %234 = math.tanh %233 : vector<8x8xf32>
    %235 = vector.broadcast %8 : f32 to vector<8x8xf32>
    %236 = arith.mulf %235, %234 : vector<8x8xf32>
    %237 = arith.addf %228, %236 : vector<8x8xf32>
    %238 = vector.extract_strided_slice %190 {offsets = [5, 0], sizes = [1, 8], strides = [1, 1]} : vector<16x8xf32> to vector<1x8xf32>
    %239 = vector.extract_strided_slice %191 {offsets = [0, 5], sizes = [8, 1], strides = [1, 1]} : vector<8x16xf32> to vector<8x1xf32>
    %240 = vector.broadcast %239 : vector<8x1xf32> to vector<8x8xf32>
    %241 = vector.broadcast %238 : vector<1x8xf32> to vector<8x8xf32>
    %242 = arith.addf %240, %241 : vector<8x8xf32>
    %243 = math.tanh %242 : vector<8x8xf32>
    %244 = vector.broadcast %9 : f32 to vector<8x8xf32>
    %245 = arith.mulf %244, %243 : vector<8x8xf32>
    %246 = arith.addf %237, %245 : vector<8x8xf32>
    %247 = vector.extract_strided_slice %190 {offsets = [6, 0], sizes = [1, 8], strides = [1, 1]} : vector<16x8xf32> to vector<1x8xf32>
    %248 = vector.extract_strided_slice %191 {offsets = [0, 6], sizes = [8, 1], strides = [1, 1]} : vector<8x16xf32> to vector<8x1xf32>
    %249 = vector.broadcast %248 : vector<8x1xf32> to vector<8x8xf32>
    %250 = vector.broadcast %247 : vector<1x8xf32> to vector<8x8xf32>
    %251 = arith.addf %249, %250 : vector<8x8xf32>
    %252 = math.tanh %251 : vector<8x8xf32>
    %253 = vector.broadcast %10 : f32 to vector<8x8xf32>
    %254 = arith.mulf %253, %252 : vector<8x8xf32>
    %255 = arith.addf %246, %254 : vector<8x8xf32>
    %256 = vector.extract_strided_slice %190 {offsets = [7, 0], sizes = [1, 8], strides = [1, 1]} : vector<16x8xf32> to vector<1x8xf32>
    %257 = vector.extract_strided_slice %191 {offsets = [0, 7], sizes = [8, 1], strides = [1, 1]} : vector<8x16xf32> to vector<8x1xf32>
    %258 = vector.broadcast %257 : vector<8x1xf32> to vector<8x8xf32>
    %259 = vector.broadcast %256 : vector<1x8xf32> to vector<8x8xf32>
    %260 = arith.addf %258, %259 : vector<8x8xf32>
    %261 = math.tanh %260 : vector<8x8xf32>
    %262 = vector.broadcast %11 : f32 to vector<8x8xf32>
    %263 = arith.mulf %262, %261 : vector<8x8xf32>
    %264 = arith.addf %255, %263 : vector<8x8xf32>
    %265 = vector.extract_strided_slice %190 {offsets = [8, 0], sizes = [1, 8], strides = [1, 1]} : vector<16x8xf32> to vector<1x8xf32>
    %266 = vector.extract_strided_slice %191 {offsets = [0, 8], sizes = [8, 1], strides = [1, 1]} : vector<8x16xf32> to vector<8x1xf32>
    %267 = vector.broadcast %266 : vector<8x1xf32> to vector<8x8xf32>
    %268 = vector.broadcast %265 : vector<1x8xf32> to vector<8x8xf32>
    %269 = arith.addf %267, %268 : vector<8x8xf32>
    %270 = math.tanh %269 : vector<8x8xf32>
    %271 = vector.broadcast %12 : f32 to vector<8x8xf32>
    %272 = arith.mulf %271, %270 : vector<8x8xf32>
    %273 = arith.addf %264, %272 : vector<8x8xf32>
    %274 = vector.extract_strided_slice %190 {offsets = [9, 0], sizes = [1, 8], strides = [1, 1]} : vector<16x8xf32> to vector<1x8xf32>
    %275 = vector.extract_strided_slice %191 {offsets = [0, 9], sizes = [8, 1], strides = [1, 1]} : vector<8x16xf32> to vector<8x1xf32>
    %276 = vector.broadcast %275 : vector<8x1xf32> to vector<8x8xf32>
    %277 = vector.broadcast %274 : vector<1x8xf32> to vector<8x8xf32>
    %278 = arith.addf %276, %277 : vector<8x8xf32>
    %279 = math.tanh %278 : vector<8x8xf32>
    %280 = vector.broadcast %13 : f32 to vector<8x8xf32>
    %281 = arith.mulf %280, %279 : vector<8x8xf32>
    %282 = arith.addf %273, %281 : vector<8x8xf32>
    %283 = vector.extract_strided_slice %190 {offsets = [10, 0], sizes = [1, 8], strides = [1, 1]} : vector<16x8xf32> to vector<1x8xf32>
    %284 = vector.extract_strided_slice %191 {offsets = [0, 10], sizes = [8, 1], strides = [1, 1]} : vector<8x16xf32> to vector<8x1xf32>
    %285 = vector.broadcast %284 : vector<8x1xf32> to vector<8x8xf32>
    %286 = vector.broadcast %283 : vector<1x8xf32> to vector<8x8xf32>
    %287 = arith.addf %285, %286 : vector<8x8xf32>
    %288 = math.tanh %287 : vector<8x8xf32>
    %289 = vector.broadcast %14 : f32 to vector<8x8xf32>
    %290 = arith.mulf %289, %288 : vector<8x8xf32>
    %291 = arith.addf %282, %290 : vector<8x8xf32>
    %292 = vector.extract_strided_slice %190 {offsets = [11, 0], sizes = [1, 8], strides = [1, 1]} : vector<16x8xf32> to vector<1x8xf32>
    %293 = vector.extract_strided_slice %191 {offsets = [0, 11], sizes = [8, 1], strides = [1, 1]} : vector<8x16xf32> to vector<8x1xf32>
    %294 = vector.broadcast %293 : vector<8x1xf32> to vector<8x8xf32>
    %295 = vector.broadcast %292 : vector<1x8xf32> to vector<8x8xf32>
    %296 = arith.addf %294, %295 : vector<8x8xf32>
    %297 = math.tanh %296 : vector<8x8xf32>
    %298 = vector.broadcast %15 : f32 to vector<8x8xf32>
    %299 = arith.mulf %298, %297 : vector<8x8xf32>
    %300 = arith.addf %291, %299 : vector<8x8xf32>
    %301 = vector.extract_strided_slice %190 {offsets = [12, 0], sizes = [1, 8], strides = [1, 1]} : vector<16x8xf32> to vector<1x8xf32>
    %302 = vector.extract_strided_slice %191 {offsets = [0, 12], sizes = [8, 1], strides = [1, 1]} : vector<8x16xf32> to vector<8x1xf32>
    %303 = vector.broadcast %302 : vector<8x1xf32> to vector<8x8xf32>
    %304 = vector.broadcast %301 : vector<1x8xf32> to vector<8x8xf32>
    %305 = arith.addf %303, %304 : vector<8x8xf32>
    %306 = math.tanh %305 : vector<8x8xf32>
    %307 = vector.broadcast %16 : f32 to vector<8x8xf32>
    %308 = arith.mulf %307, %306 : vector<8x8xf32>
    %309 = arith.addf %300, %308 : vector<8x8xf32>
    %310 = vector.extract_strided_slice %190 {offsets = [13, 0], sizes = [1, 8], strides = [1, 1]} : vector<16x8xf32> to vector<1x8xf32>
    %311 = vector.extract_strided_slice %191 {offsets = [0, 13], sizes = [8, 1], strides = [1, 1]} : vector<8x16xf32> to vector<8x1xf32>
    %312 = vector.broadcast %311 : vector<8x1xf32> to vector<8x8xf32>
    %313 = vector.broadcast %310 : vector<1x8xf32> to vector<8x8xf32>
    %314 = arith.addf %312, %313 : vector<8x8xf32>
    %315 = math.tanh %314 : vector<8x8xf32>
    %316 = vector.broadcast %17 : f32 to vector<8x8xf32>
    %317 = arith.mulf %316, %315 : vector<8x8xf32>
    %318 = arith.addf %309, %317 : vector<8x8xf32>
    %319 = vector.extract_strided_slice %190 {offsets = [14, 0], sizes = [1, 8], strides = [1, 1]} : vector<16x8xf32> to vector<1x8xf32>
    %320 = vector.extract_strided_slice %191 {offsets = [0, 14], sizes = [8, 1], strides = [1, 1]} : vector<8x16xf32> to vector<8x1xf32>
    %321 = vector.broadcast %320 : vector<8x1xf32> to vector<8x8xf32>
    %322 = vector.broadcast %319 : vector<1x8xf32> to vector<8x8xf32>
    %323 = arith.addf %321, %322 : vector<8x8xf32>
    %324 = math.tanh %323 : vector<8x8xf32>
    %325 = vector.broadcast %18 : f32 to vector<8x8xf32>
    %326 = arith.mulf %325, %324 : vector<8x8xf32>
    %327 = arith.addf %318, %326 : vector<8x8xf32>
    %328 = vector.extract_strided_slice %190 {offsets = [15, 0], sizes = [1, 8], strides = [1, 1]} : vector<16x8xf32> to vector<1x8xf32>
    %329 = vector.extract_strided_slice %191 {offsets = [0, 15], sizes = [8, 1], strides = [1, 1]} : vector<8x16xf32> to vector<8x1xf32>
    %330 = vector.broadcast %329 : vector<8x1xf32> to vector<8x8xf32>
    %331 = vector.broadcast %328 : vector<1x8xf32> to vector<8x8xf32>
    %332 = arith.addf %330, %331 : vector<8x8xf32>
    %333 = math.tanh %332 : vector<8x8xf32>
    %334 = vector.broadcast %19 : f32 to vector<8x8xf32>
    %335 = arith.mulf %334, %333 : vector<8x8xf32>
    %336 = arith.addf %327, %335 : vector<8x8xf32>
    %cst_22 = arith.constant 0xFF800000 : f32
    %337 = vector.broadcast %cst_22 : f32 to vector<8x8xf32>
    %338 = arith.select %22, %337, %336 : vector<8x8xi1>, vector<8x8xf32>
    %cst_23 = arith.constant dense<0xFF800000> : vector<8xf32>
    %339 = vector.multi_reduction <maximumf>, %338, %cst_23 [1] : vector<8x8xf32> to vector<8xf32>
    %340 = vector.shape_cast %339 : vector<8xf32> to vector<8x1xf32>
    %341 = vector.broadcast %340 : vector<8x1xf32> to vector<8x8xf32>
    %342 = arith.subf %338, %341 : vector<8x8xf32>
    %343 = math.exp %342 : vector<8x8xf32>
    %cst_24 = arith.constant dense<0.000000e+00> : vector<8xf32>
    %344 = vector.multi_reduction <add>, %343, %cst_24 [1] : vector<8x8xf32> to vector<8xf32>
    %345 = vector.shape_cast %344 : vector<8xf32> to vector<8x1xf32>
    %346 = tpu.reciprocal %345 : vector<8x1xf32> -> vector<8x1xf32>
    %347 = vector.broadcast %346 : vector<8x1xf32> to vector<8x8xf32>
    %348 = arith.mulf %343, %347 : vector<8x8xf32>
    %cst_25 = arith.constant dense<0.000000e+00> : vector<8x128xf32>
    %349 = tpu.matmul %348, %188, %cst_25 {dimension_numbers = #tpu.dot_dimension_numbers<[1], [0], [0], [1], [0, 0, 1, 1], [], []>} : vector<8x8xf32>, vector<8x128xf32>, vector<8x128xf32> -> vector<8x128xf32>
    %c8_26 = arith.constant 8 : index
    %c0_27 = arith.constant 0 : index
    %350 = vector.load %arg7[%c8_26, %c0_27] : memref<16x128xf32, #tpu.memory_space<vmem>>, vector<8x128xf32>
    tpu.vector_store %arg7[%c8_26, %c0_27], %349 {strides = array<i32>} : memref<16x128xf32, #tpu.memory_space<vmem>>, vector<8x128xf32>,
    %c0_28 = arith.constant 0 : index
    %c0_29 = arith.constant 0 : index
    %351 = vector.load %arg7[%c0_28, %c0_29] : memref<16x128xf32, #tpu.memory_space<vmem>>, vector<16x128xf32>
    %c0_30 = arith.constant 0 : index
    %c0_31 = arith.constant 0 : index
    %352 = vector.load %arg4[%c0_30, %c0_31] : memref<128x128xf32, #tpu.memory_space<vmem>>, vector<128x128xf32>
    %cst_32 = arith.constant dense<0.000000e+00> : vector<16x128xf32>
    %353 = tpu.matmul %351, %352, %cst_32 {dimension_numbers = #tpu.dot_dimension_numbers<[1], [0], [0], [1], [0, 0, 1, 1], [], []>} : vector<16x128xf32>, vector<128x128xf32>, vector<16x128xf32> -> vector<16x128xf32>
    %c0_33 = arith.constant 0 : index
    %c0_34 = arith.constant 0 : index
    %354 = vector.load %arg5[%c0_33, %c0_34] : memref<1x128xf32, #tpu.memory_space<vmem>>, vector<1x128xf32>
    %355 = vector.broadcast %354 : vector<1x128xf32> to vector<16x128xf32>
    %356 = arith.addf %353, %355 : vector<16x128xf32>
    %cst_35 = arith.constant 0.000000e+00 : f32
    %357 = vector.broadcast %cst_35 : f32 to vector<16x128xf32>
    %358 = arith.maximumf %356, %357 : vector<16x128xf32>
    %c0_36 = arith.constant 0 : index
    %c0_37 = arith.constant 0 : index
    %359 = vector.load %arg1[%c0_36, %c0_37] : memref<16x128xf32, #tpu.memory_space<vmem>>, vector<16x128xf32>
    %360 = arith.addf %359, %358 : vector<16x128xf32>
    %c0_38 = arith.constant 0 : index
    %c0_39 = arith.constant 0 : index
    %361 = vector.load %arg6[%c0_38, %c0_39] : memref<16x128xf32, #tpu.memory_space<vmem>>, vector<16x128xf32>
    tpu.vector_store %arg6[%c0_38, %c0_39], %360 {strides = array<i32>} : memref<16x128xf32, #tpu.memory_space<vmem>>, vector<16x128xf32>,
    return
  }
  func.func @transform_0(%arg0: i32) -> (i32, i32) {
    %c0_i32 = arith.constant 0 : i32
    %c0_i32_0 = arith.constant 0 : i32
    return %arg0, %c0_i32 : i32, i32
  }
  func.func @transform_1(%arg0: i32) -> (i32, i32) {
    %c0_i32 = arith.constant 0 : i32
    %c0_i32_0 = arith.constant 0 : i32
    %c0_i32_1 = arith.constant 0 : i32
    return %c0_i32, %c0_i32_0 : i32, i32
  }
  func.func @transform_2(%arg0: i32) -> i32 {
    %c0_i32 = arith.constant 0 : i32
    %c0_i32_0 = arith.constant 0 : i32
    return %c0_i32 : i32
  }
  func.func @transform_3(%arg0: i32) -> (i32, i32) {
    %c0_i32 = arith.constant 0 : i32
    %c0_i32_0 = arith.constant 0 : i32
    %c0_i32_1 = arith.constant 0 : i32
    return %c0_i32, %c0_i32_0 : i32, i32
  }
  func.func @transform_4(%arg0: i32) -> (i32, i32) {
    %c0_i32 = arith.constant 0 : i32
    %c0_i32_0 = arith.constant 0 : i32
    %c0_i32_1 = arith.constant 0 : i32
    return %c0_i32, %c0_i32_0 : i32, i32
  }
  func.func @transform_5(%arg0: i32) -> (i32, i32) {
    %c0_i32 = arith.constant 0 : i32
    %c0_i32_0 = arith.constant 0 : i32
    return %arg0, %c0_i32 : i32, i32
  }
}

</mosaic_0001>

<llo_original>
// kernel: tpu_custom_call.1
$region0: #{tpu_custom_call.1}
  #allocation0 [shape = 'u32[]', space=smem, size = 0x4, offset = 0x4, fixed_abs, tag = 'smem constant byte address 0x4 - core index']
  #allocation1 [shape = 'u32[144,128]{1,0:T(1,128)}', space=vmem, size = 0x12000, scoped, tag = 'internal scratch']
  #allocation2 [shape = 'f32[16,128]{1,0:T(8,128)}', space=vmem, size = 0x2000, scoped, tag = 'scratch operand']
  #allocation3 [shape = 'f32[16,32]{1,0:T(8,128)}', space=vmem, size = 0x2000, scoped, tag = 'scratch operand']
  %s0 = inlined_call_operand.vmem [shape: f32[16,128], index: 0, kind: input, shape index: {}]
  %s1 = inlined_call_operand.vmem [shape: f32[128,32], index: 1, kind: input, shape index: {}]
  %s2 = inlined_call_operand.vmem [shape: f32[16], index: 2, kind: input, shape index: {}]
  %s3 = inlined_call_operand.vmem [shape: f32[128,128], index: 3, kind: input, shape index: {}]
  %s4 = inlined_call_operand.vmem [shape: f32[1,128], index: 4, kind: input, shape index: {}]
  %s5 = inlined_call_operand.hbm [shape: f32[16,128], index: 5, kind: output, shape index: {}]
  %s6 = sld [smem:[#allocation0]]
  $region34: #{tpu_custom_call.1} parent=0
    _
  %s8 = ssub.s32 1, %s6
  %s9 = scalar_select 0, %s8, %s6
  $region1: #{tpu_custom_call.1} parent=0
    #allocation4 [shape = 'u8[512]{0}', space=smem, size = 0x200, scoped, tag = 'input window, operand 2, single buffered']
    #allocation5 [shape = 's32[1]{0}', space=sflag, size = 0x4, scoped, tag = 'scoped memory for tpu_custom_call.1']
    #allocation6 [shape = 's32[1]{0}', space=sflag, size = 0x4, scoped, tag = 'scoped memory for tpu_custom_call.1']
    #allocation7 [shape = 'u8[8192]{0}', space=vmem, size = 0x2000, scoped, tag = 'output window, operand 0, single buffered']
    %10 = vsyncpa [#allocation6], 0
    %11 = vsyncpa [#allocation5], 0
    // Predicated region
    $region2: #{tpu_custom_call.1} parent=1 // pred_check
      _
    $region3: #{tpu_custom_call.1} parent=1 // pred_check_branch
      %13 = sbr.rel (0) target = $region5
    $region4: #{tpu_custom_call.1} parent=1 // pred_region
      _
    $region5: #{tpu_custom_call.1} parent=1 // pred_fallthru
      _
    // Predicated region
    $region6: #{tpu_custom_call.1} parent=1 // pred_check
      _
    $region7: #{tpu_custom_call.1} parent=1 // pred_check_branch
      %15 = sbr.rel (0) target = $region9
    $region8: #{tpu_custom_call.1} parent=1 // pred_region
      _
    $region9: #{tpu_custom_call.1} parent=1 // pred_fallthru
      _
    // Predicated region
    $region10: #{tpu_custom_call.1} parent=1 // pred_check
      _
    $region11: #{tpu_custom_call.1} parent=1 // pred_check_branch
      %17 = sbr.rel (0) target = $region13
    $region12: #{tpu_custom_call.1} parent=1 // pred_region
      %s19 = ssub.s32 16, 16
      %20 = vsyncadd [#allocation6], %s19
      %s22 = sshll.u32 %s2, 4
      %s23 = int_to_ptr.vmem [resolvable:$true] %s22
      %25 = dma.vmem_to_smem %s23, 16, [#allocation4], [#allocation6]
    $region13: #{tpu_custom_call.1} parent=1 // pred_fallthru
      _
    // Predicated region
    $region14: #{tpu_custom_call.1} parent=1 // pred_check
      _
    $region15: #{tpu_custom_call.1} parent=1 // pred_check_branch
      %27 = sbr.rel (0) target = $region17
    $region16: #{tpu_custom_call.1} parent=1 // pred_region
      _
    $region17: #{tpu_custom_call.1} parent=1 // pred_fallthru
      _
    // Predicated region
    $region18: #{tpu_custom_call.1} parent=1 // pred_check
      _
    $region19: #{tpu_custom_call.1} parent=1 // pred_check_branch
      %29 = sbr.rel (0) target = $region21
    $region20: #{tpu_custom_call.1} parent=1 // pred_region
      _
    $region21: #{tpu_custom_call.1} parent=1 // pred_fallthru
      _
    // Predicated region
    $region22: #{tpu_custom_call.1} parent=1 // pred_check
      _
    $region23: #{tpu_custom_call.1} parent=1 // pred_check_branch
      %31 = sbr.rel (0) target = $region25
    $region24: #{tpu_custom_call.1} parent=1 // pred_region
      %32 = dma.done [#allocation6], 16
    $region25: #{tpu_custom_call.1} parent=1 // pred_fallthru
      _
    %33 = sfence
    %v34 = vld [vmem:[%s0] sm:$0xff]
    %v35 = vld [vmem:[%s0 + $0x8] sm:$0xff]
    %v36 = vld [vmem:[%s1] sm:$0xff]
    %v37 = vld [vmem:[%s1 + $0x8] sm:$0xff]
    %v38 = vld [vmem:[%s1 + $0x10] sm:$0xff]
    %v39 = vld [vmem:[%s1 + $0x18] sm:$0xff]
    %v40 = vld [vmem:[%s1 + $0x20] sm:$0xff]
    %v41 = vld [vmem:[%s1 + $0x28] sm:$0xff]
    %v42 = vld [vmem:[%s1 + $0x30] sm:$0xff]
    %v43 = vld [vmem:[%s1 + $0x38] sm:$0xff]
    %v44 = vld [vmem:[%s1 + $0x40] sm:$0xff]
    %v45 = vld [vmem:[%s1 + $0x48] sm:$0xff]
    %v46 = vld [vmem:[%s1 + $0x50] sm:$0xff]
    %v47 = vld [vmem:[%s1 + $0x58] sm:$0xff]
    %v48 = vld [vmem:[%s1 + $0x60] sm:$0xff]
    %v49 = vld [vmem:[%s1 + $0x68] sm:$0xff]
    %v50 = vld [vmem:[%s1 + $0x70] sm:$0xff]
    %v51 = vld [vmem:[%s1 + $0x78] sm:$0xff]
    %52 = vmatprep.subr.mxu0 0.0
    %53 = vmatpush1.msra.mxu0 %v36
    %54 = vmatprep.subr.mxu0 0.0
    %55 = vmatpush1.msra.mxu0 %v37
    %56 = vmatprep.subr.mxu0 0.0
    %57 = vmatpush1.msra.mxu0 %v38
    %58 = vmatprep.subr.mxu0 0.0
    %59 = vmatpush1.msra.mxu0 %v39
    %60 = vmatprep.subr.mxu0 0.0
    %61 = vmatpush1.msra.mxu0 %v40
    %62 = vmatprep.subr.mxu0 0.0
    %63 = vmatpush1.msra.mxu0 %v41
    %64 = vmatprep.subr.mxu0 0.0
    %65 = vmatpush1.msra.mxu0 %v42
    %66 = vmatprep.subr.mxu0 0.0
    %67 = vmatpush1.msra.mxu0 %v43
    %68 = vmatprep.subr.mxu0 0.0
    %69 = vmatpush1.msra.mxu0 %v44
    %70 = vmatprep.subr.mxu0 0.0
    %71 = vmatpush1.msra.mxu0 %v45
    %72 = vmatprep.subr.mxu0 0.0
    %73 = vmatpush1.msra.mxu0 %v46
    %74 = vmatprep.subr.mxu0 0.0
    %75 = vmatpush1.msra.mxu0 %v47
    %76 = vmatprep.subr.mxu0 0.0
    %77 = vmatpush1.msra.mxu0 %v48
    %78 = vmatprep.subr.mxu0 0.0
    %79 = vmatpush1.msra.mxu0 %v49
    %80 = vmatprep.subr.mxu0 0.0
    %81 = vmatpush1.msra.mxu0 %v50
    %82 = vmatprep.subr.mxu0 0.0
    %83 = vmatpush1.msra.mxu0 %v51
    %84 = vmatprep.subr.mxu0 0.0
    %85 = vmatpush1.msra.mxu0 0.0
    %86 = vmatprep.subr.mxu0 0.0
    %87 = vmatpush1.msra.mxu0 0.0
    %88 = vmatprep.subr.mxu0 0.0
    %89 = vmatpush1.msra.mxu0 0.0
    %90 = vmatprep.subr.mxu0 0.0
    %91 = vmatpush1.msra.mxu0 0.0
    %92 = vmatprep.subr.mxu0 0.0
    %93 = vmatpush1.msra.mxu0 0.0
    %94 = vmatprep.subr.mxu0 0.0
    %95 = vmatpush1.msra.mxu0 0.0
    %96 = vmatprep.subr.mxu0 0.0
    %97 = vmatpush1.msra.mxu0 0.0
    %98 = vmatprep.subr.mxu0 0.0
    %99 = vmatpush1.msra.mxu0 0.0
    %100 = vmatprep.subr.mxu0 0.0
    %101 = vmatpush1.msra.mxu0 0.0
    %102 = vmatprep.subr.mxu0 0.0
    %103 = vmatpush1.msra.mxu0 0.0
    %104 = vmatprep.subr.mxu0 0.0
    %105 = vmatpush1.msra.mxu0 0.0
    %106 = vmatprep.subr.mxu0 0.0
    %107 = vmatpush1.msra.mxu0 0.0
    %108 = vmatprep.subr.mxu0 0.0
    %109 = vmatpush1.msra.mxu0 0.0
    %110 = vmatprep.subr.mxu0 0.0
    %111 = vmatpush1.msra.mxu0 0.0
    %112 = vmatprep.subr.mxu0 0.0
    %113 = vmatpush1.msra.mxu0 0.0
    %114 = vmatprep.subr.mxu0 0.0
    %115 = vmatpush1.msra.mxu0 0.0
    %116 = vmatprep.mubr.f32.mxu0 0.0
    %117 = vmatmul.mubr.f32.gmra.mrb[0].mxu0 %v34
    %v118 = vpop.f32.mrb[0].mxu0
    %v119 = vadd.f32 0.0, %v118
    %v120 = vpop.f32.mrb[0].mxu0
    %121 = vmatprep.mubr.f32.mxu0 0.0
    %122 = vmatmul.mubr.f32.gmra.mrb[0].mxu0 %v35
    %v123 = vpop.f32.mrb[0].mxu0
    %v124 = vadd.f32 0.0, %v123
    %v125 = vpop.f32.mrb[0].mxu0
    %126 = vdwg.mxu0
    %vm127 = vcmask 261120
    %128 = vst.msk [vmem:[#allocation3] sm:$0xff] %vm127, %v119
    %129 = vst.msk [vmem:[#allocation3 + $0x8] sm:$0xff] %vm127, %v124
    %s130 = sld [smem:[#allocation4]]
    %s131 = sld [smem:[#allocation4 + $0x1]]
    %s132 = sld [smem:[#allocation4 + $0x2]]
    %s133 = sld [smem:[#allocation4 + $0x3]]
    %s134 = sld [smem:[#allocation4 + $0x4]]
    %s135 = sld [smem:[#allocation4 + $0x5]]
    %s136 = sld [smem:[#allocation4 + $0x6]]
    %s137 = sld [smem:[#allocation4 + $0x7]]
    %s138 = sld [smem:[#allocation4 + $0x8]]
    %s139 = sld [smem:[#allocation4 + $0x9]]
    %s140 = sld [smem:[#allocation4 + $0xa]]
    %s141 = sld [smem:[#allocation4 + $0xb]]
    %s142 = sld [smem:[#allocation4 + $0xc]]
    %s143 = sld [smem:[#allocation4 + $0xd]]
    %s144 = sld [smem:[#allocation4 + $0xe]]
    %s145 = sld [smem:[#allocation4 + $0xf]]
    %v146 = vlaneseq
    %v147 = vshrl.u32 %v146, 7
    %v148 = vlaneseq
    %v149 = vand.u32 %v148, 127
    %vm150 = vcmp.eq.s32.totalorder %v147, %v149
    %v151 = vld [vmem:[#allocation3] sm:$0xff]
    %v152 = vld [vmem:[%s0] sm:$0xff]
    %153 = vxpose.xlu0.b32.start [1/16] %v151, 128
    %154 = vxpose.xlu0.b32.cont [2/16] 0.0, 128
    %155 = vxpose.xlu0.b32.cont [3/16] 0.0, 128
    %156 = vxpose.xlu0.b32.cont [4/16] 0.0, 128
    %157 = vxpose.xlu0.b32.cont [5/16] 0.0, 128
    %158 = vxpose.xlu0.b32.cont [6/16] 0.0, 128
    %159 = vxpose.xlu0.b32.cont [7/16] 0.0, 128
    %160 = vxpose.xlu0.b32.cont [8/16] 0.0, 128
    %161 = vxpose.xlu0.b32.cont [9/16] 0.0, 128
    %162 = vxpose.xlu0.b32.cont [10/16] 0.0, 128
    %163 = vxpose.xlu0.b32.cont [11/16] 0.0, 128
    %164 = vxpose.xlu0.b32.cont [12/16] 0.0, 128
    %165 = vxpose.xlu0.b32.cont [13/16] 0.0, 128
    %166 = vxpose.xlu0.b32.cont [14/16] 0.0, 128
    %167 = vxpose.xlu0.b32.cont [15/16] 0.0, 128
    %168 = vxpose.xlu0.b32.end [16/16] 0.0, 128
    %v169 = vpop.trf.xlu0
    %v170 = vpop.trf.xlu0
    %v171 = vpop.trf.xlu0
    %v172 = vpop.trf.xlu0
    %v173 = vpop.trf.xlu0
    %v174 = vpop.trf.xlu0
    %v175 = vpop.trf.xlu0
    %v176 = vpop.trf.xlu0
    %v177 = vpop.trf.xlu0
    %v178 = vpop.trf.xlu0
    %v179 = vpop.trf.xlu0
    %v180 = vpop.trf.xlu0
    %v181 = vpop.trf.xlu0
    %v182 = vpop.trf.xlu0
    %v183 = vpop.trf.xlu0
    %v184 = vpop.trf.xlu0
    %186 = vset.pattern.permute.xlu0 16
    %187 = vperm.xlu0 %186, %v151
    %v188 = vpop.permute.xlu0 %187
    %v190 = vlaneseq
    %v191 = vshrl.u32 %v190, 7
    %v192 = vsub.s32 0, %v191
    %v193 = vrot.slane %v169, %v192
    %v194 = vadd.f32 %v188, %v193
    %v195 = vtanh.pop %v194
    %v196 = vstv %s130
    %v197 = vmul.f32 %v196, %v195
    %v198 = vadd.f32 %v197, 0.0
    %199 = vset.pattern.permute.xlu0 17
    %200 = vperm.xlu0 %199, %v151
    %v201 = vpop.permute.xlu0 %200
    %v203 = vlaneseq
    %v204 = vshrl.u32 %v203, 7
    %v205 = vsub.s32 1, %v204
    %v206 = vrot.slane %v169, %v205
    %v207 = vadd.f32 %v201, %v206
    %v208 = vtanh.pop %v207
    %v209 = vstv %s131
    %v210 = vmul.f32 %v209, %v208
    %v211 = vadd.f32 %v198, %v210
    %212 = vset.pattern.permute.xlu0 18
    %213 = vperm.xlu0 %212, %v151
    %v214 = vpop.permute.xlu0 %213
    %v216 = vlaneseq
    %v217 = vshrl.u32 %v216, 7
    %v218 = vsub.s32 2, %v217
    %v219 = vrot.slane %v169, %v218
    %v220 = vadd.f32 %v214, %v219
    %v221 = vtanh.pop %v220
    %v222 = vstv %s132
    %v223 = vmul.f32 %v222, %v221
    %v224 = vadd.f32 %v211, %v223
    %225 = vset.pattern.permute.xlu0 19
    %226 = vperm.xlu0 %225, %v151
    %v227 = vpop.permute.xlu0 %226
    %v229 = vlaneseq
    %v230 = vshrl.u32 %v229, 7
    %v231 = vsub.s32 3, %v230
    %v232 = vrot.slane %v169, %v231
    %v233 = vadd.f32 %v227, %v232
    %v234 = vtanh.pop %v233
    %v235 = vstv %s133
    %v236 = vmul.f32 %v235, %v234
    %v237 = vadd.f32 %v224, %v236
    %238 = vset.pattern.permute.xlu0 20
    %239 = vperm.xlu0 %238, %v151
    %v240 = vpop.permute.xlu0 %239
    %v242 = vlaneseq
    %v243 = vshrl.u32 %v242, 7
    %v244 = vsub.s32 4, %v243
    %v245 = vrot.slane %v169, %v244
    %v246 = vadd.f32 %v240, %v245
    %v247 = vtanh.pop %v246
    %v248 = vstv %s134
    %v249 = vmul.f32 %v248, %v247
    %v250 = vadd.f32 %v237, %v249
    %251 = vset.pattern.permute.xlu0 21
    %252 = vperm.xlu0 %251, %v151
    %v253 = vpop.permute.xlu0 %252
    %v255 = vlaneseq
    %v256 = vshrl.u32 %v255, 7
    %v257 = vsub.s32 5, %v256
    %v258 = vrot.slane %v169, %v257
    %v259 = vadd.f32 %v253, %v258
    %v260 = vtanh.pop %v259
    %v261 = vstv %s135
    %v262 = vmul.f32 %v261, %v260
    %v263 = vadd.f32 %v250, %v262
    %264 = vset.pattern.permute.xlu0 22
    %265 = vperm.xlu0 %264, %v151
    %v266 = vpop.permute.xlu0 %265
    %v268 = vlaneseq
    %v269 = vshrl.u32 %v268, 7
    %v270 = vsub.s32 6, %v269
    %v271 = vrot.slane %v169, %v270
    %v272 = vadd.f32 %v266, %v271
    %v273 = vtanh.pop %v272
    %v274 = vstv %s136
    %v275 = vmul.f32 %v274, %v273
    %v276 = vadd.f32 %v263, %v275
    %277 = vset.pattern.permute.xlu0 23
    %278 = vperm.xlu0 %277, %v151
    %v279 = vpop.permute.xlu0 %278
    %v281 = vlaneseq
    %v282 = vshrl.u32 %v281, 7
    %v283 = vsub.s32 7, %v282
    %v284 = vrot.slane %v169, %v283
    %v285 = vadd.f32 %v279, %v284
    %v286 = vtanh.pop %v285
    %v287 = vstv %s137
    %v288 = vmul.f32 %v287, %v286
    %v289 = vadd.f32 %v276, %v288
    %290 = vset.pattern.permute.xlu0 24
    %291 = vperm.xlu0 %290, %v151
    %v292 = vpop.permute.xlu0 %291
    %v294 = vlaneseq
    %v295 = vshrl.u32 %v294, 7
    %v296 = vsub.s32 0, %v295
    %v297 = vrot.slane %v170, %v296
    %v298 = vadd.f32 %v292, %v297
    %v299 = vtanh.pop %v298
    %v300 = vstv %s138
    %v301 = vmul.f32 %v300, %v299
    %v302 = vadd.f32 %v289, %v301
    %303 = vset.pattern.permute.xlu0 25
    %304 = vperm.xlu0 %303, %v151
    %v305 = vpop.permute.xlu0 %304
    %v307 = vlaneseq
    %v308 = vshrl.u32 %v307, 7
    %v309 = vsub.s32 1, %v308
    %v310 = vrot.slane %v170, %v309
    %v311 = vadd.f32 %v305, %v310
    %v312 = vtanh.pop %v311
    %v313 = vstv %s139
    %v314 = vmul.f32 %v313, %v312
    %v315 = vadd.f32 %v302, %v314
    %316 = vset.pattern.permute.xlu0 26
    %317 = vperm.xlu0 %316, %v151
    %v318 = vpop.permute.xlu0 %317
    %v320 = vlaneseq
    %v321 = vshrl.u32 %v320, 7
    %v322 = vsub.s32 2, %v321
    %v323 = vrot.slane %v170, %v322
    %v324 = vadd.f32 %v318, %v323
    %v325 = vtanh.pop %v324
    %v326 = vstv %s140
    %v327 = vmul.f32 %v326, %v325
    %v328 = vadd.f32 %v315, %v327
    %329 = vset.pattern.permute.xlu0 27
    %330 = vperm.xlu0 %329, %v151
    %v331 = vpop.permute.xlu0 %330
    %v333 = vlaneseq
    %v334 = vshrl.u32 %v333, 7
    %v335 = vsub.s32 3, %v334
    %v336 = vrot.slane %v170, %v335
    %v337 = vadd.f32 %v331, %v336
    %v338 = vtanh.pop %v337
    %v339 = vstv %s141
    %v340 = vmul.f32 %v339, %v338
    %v341 = vadd.f32 %v328, %v340
    %342 = vset.pattern.permute.xlu0 28
    %343 = vperm.xlu0 %342, %v151
    %v344 = vpop.permute.xlu0 %343
    %v346 = vlaneseq
    %v347 = vshrl.u32 %v346, 7
    %v348 = vsub.s32 4, %v347
    %v349 = vrot.slane %v170, %v348
    %v350 = vadd.f32 %v344, %v349
    %v351 = vtanh.pop %v350
    %v352 = vstv %s142
    %v353 = vmul.f32 %v352, %v351
    %v354 = vadd.f32 %v341, %v353
    %355 = vset.pattern.permute.xlu0 29
    %356 = vperm.xlu0 %355, %v151
    %v357 = vpop.permute.xlu0 %356
    %v359 = vlaneseq
    %v360 = vshrl.u32 %v359, 7
    %v361 = vsub.s32 5, %v360
    %v362 = vrot.slane %v170, %v361
    %v363 = vadd.f32 %v357, %v362
    %v364 = vtanh.pop %v363
    %v365 = vstv %s143
    %v366 = vmul.f32 %v365, %v364
    %v367 = vadd.f32 %v354, %v366
    %368 = vset.pattern.permute.xlu0 30
    %369 = vperm.xlu0 %368, %v151
    %v370 = vpop.permute.xlu0 %369
    %v372 = vlaneseq
    %v373 = vshrl.u32 %v372, 7
    %v374 = vsub.s32 6, %v373
    %v375 = vrot.slane %v170, %v374
    %v376 = vadd.f32 %v370, %v375
    %v377 = vtanh.pop %v376
    %v378 = vstv %s144
    %v379 = vmul.f32 %v378, %v377
    %v380 = vadd.f32 %v367, %v379
    %381 = vset.pattern.permute.xlu0 31
    %382 = vperm.xlu0 %381, %v151
    %v383 = vpop.permute.xlu0 %382
    %v385 = vlaneseq
    %v386 = vshrl.u32 %v385, 7
    %v387 = vsub.s32 7, %v386
    %v388 = vrot.slane %v170, %v387
    %v389 = vadd.f32 %v383, %v388
    %v390 = vtanh.pop %v389
    %v391 = vstv %s145
    %v392 = vmul.f32 %v391, %v390
    %v393 = vadd.f32 %v380, %v392
    %v394 = vsel %vm150, -inf, %v393
    %vm395 = vcmask 64512
    %v396 = vsel %vm395, %v394, -inf
    %397 = vmax.xlane.f32.xlu0 %v396
    %v398 = vpop.xlane.xlu0 %397
    %v399 = vsub.f32 %v394, %v398
    %v400 = vmul.f32 %v399, 1.442695
    %v401 = vpow.pop %v400
    %v402 = vsel %vm395, %v401, 0.0
    %403 = vadd.xlane.f32.xlu0 %v402
    %v404 = vpop.xlane.xlu0 %403
    %v405 = vrcp.pop %v404
    %v406 = vmul.f32 %v401, %v405
    %v408 = vsel %vm395, %v406, 0
    %410 = vmatprep.subr.mxu0 0.0
    %411 = vmatpush1.msra.mxu0 %v152
    %412 = vmatprep.subr.mxu0 0.0
    %413 = vmatpush1.msra.mxu0 0.0
    %414 = vmatprep.subr.mxu0 0.0
    %415 = vmatpush1.msra.mxu0 0.0
    %416 = vmatprep.subr.mxu0 0.0
    %417 = vmatpush1.msra.mxu0 0.0
    %418 = vmatprep.subr.mxu0 0.0
    %419 = vmatpush1.msra.mxu0 0.0
    %420 = vmatprep.subr.mxu0 0.0
    %421 = vmatpush1.msra.mxu0 0.0
    %422 = vmatprep.subr.mxu0 0.0
    %423 = vmatpush1.msra.mxu0 0.0
    %424 = vmatprep.subr.mxu0 0.0
    %425 = vmatpush1.msra.mxu0 0.0
    %426 = vmatprep.subr.mxu0 0.0
    %427 = vmatpush1.msra.mxu0 0.0
    %428 = vmatprep.subr.mxu0 0.0
    %429 = vmatpush1.msra.mxu0 0.0
    %430 = vmatprep.subr.mxu0 0.0
    %431 = vmatpush1.msra.mxu0 0.0
    %432 = vmatprep.subr.mxu0 0.0
    %433 = vmatpush1.msra.mxu0 0.0
    %434 = vmatprep.subr.mxu0 0.0
    %435 = vmatpush1.msra.mxu0 0.0
    %436 = vmatprep.subr.mxu0 0.0
    %437 = vmatpush1.msra.mxu0 0.0
    %438 = vmatprep.subr.mxu0 0.0
    %439 = vmatpush1.msra.mxu0 0.0
    %440 = vmatprep.subr.mxu0 0.0
    %441 = vmatpush1.msra.mxu0 0.0
    %442 = vmatprep.subr.mxu0 0.0
    %443 = vmatpush1.msra.mxu0 0.0
    %444 = vmatprep.subr.mxu0 0.0
    %445 = vmatpush1.msra.mxu0 0.0
    %446 = vmatprep.subr.mxu0 0.0
    %447 = vmatpush1.msra.mxu0 0.0
    %448 = vmatprep.subr.mxu0 0.0
    %449 = vmatpush1.msra.mxu0 0.0
    %450 = vmatprep.subr.mxu0 0.0
    %451 = vmatpush1.msra.mxu0 0.0
    %452 = vmatprep.subr.mxu0 0.0
    %453 = vmatpush1.msra.mxu0 0.0
    %454 = vmatprep.subr.mxu0 0.0
    %455 = vmatpush1.msra.mxu0 0.0
    %456 = vmatprep.subr.mxu0 0.0
    %457 = vmatpush1.msra.mxu0 0.0
    %458 = vmatprep.subr.mxu0 0.0
    %459 = vmatpush1.msra.mxu0 0.0
    %460 = vmatprep.subr.mxu0 0.0
    %461 = vmatpush1.msra.mxu0 0.0
    %462 = vmatprep.subr.mxu0 0.0
    %463 = vmatpush1.msra.mxu0 0.0
    %464 = vmatprep.subr.mxu0 0.0
    %465 = vmatpush1.msra.mxu0 0.0
    %466 = vmatprep.subr.mxu0 0.0
    %467 = vmatpush1.msra.mxu0 0.0
    %468 = vmatprep.subr.mxu0 0.0
    %469 = vmatpush1.msra.mxu0 0.0
    %470 = vmatprep.subr.mxu0 0.0
    %471 = vmatpush1.msra.mxu0 0.0
    %472 = vmatprep.subr.mxu0 0.0
    %473 = vmatpush1.msra.mxu0 0.0
    %474 = vmatprep.mubr.f32.mxu0 0.0
    %475 = vmatmul.mubr.f32.gmra.mrb[0].mxu0 %v408
    %v476 = vpop.f32.mrb[0].mxu0
    %v477 = vadd.f32 0.0, %v476
    %v478 = vpop.f32.mrb[0].mxu0
    %479 = vdwg.mxu0
    %480 = vst [vmem:[#allocation2] sm:$0xff] %v477
    %v481 = vld [vmem:[#allocation3 + $0x8] sm:$0xff]
    %v482 = vld [vmem:[%s0 + $0x8] sm:$0xff]
    %483 = vxpose.xlu0.b32.start [1/16] %v481, 128
    %484 = vxpose.xlu0.b32.cont [2/16] 0.0, 128
    %485 = vxpose.xlu0.b32.cont [3/16] 0.0, 128
    %486 = vxpose.xlu0.b32.cont [4/16] 0.0, 128
    %487 = vxpose.xlu0.b32.cont [5/16] 0.0, 128
    %488 = vxpose.xlu0.b32.cont [6/16] 0.0, 128
    %489 = vxpose.xlu0.b32.cont [7/16] 0.0, 128
    %490 = vxpose.xlu0.b32.cont [8/16] 0.0, 128
    %491 = vxpose.xlu0.b32.cont [9/16] 0.0, 128
    %492 = vxpose.xlu0.b32.cont [10/16] 0.0, 128
    %493 = vxpose.xlu0.b32.cont [11/16] 0.0, 128
    %494 = vxpose.xlu0.b32.cont [12/16] 0.0, 128
    %495 = vxpose.xlu0.b32.cont [13/16] 0.0, 128
    %496 = vxpose.xlu0.b32.cont [14/16] 0.0, 128
    %497 = vxpose.xlu0.b32.cont [15/16] 0.0, 128
    %498 = vxpose.xlu0.b32.end [16/16] 0.0, 128
    %v499 = vpop.trf.xlu0
    %v500 = vpop.trf.xlu0
    %v501 = vpop.trf.xlu0
    %v502 = vpop.trf.xlu0
    %v503 = vpop.trf.xlu0
    %v504 = vpop.trf.xlu0
    %v505 = vpop.trf.xlu0
    %v506 = vpop.trf.xlu0
    %v507 = vpop.trf.xlu0
    %v508 = vpop.trf.xlu0
    %v509 = vpop.trf.xlu0
    %v510 = vpop.trf.xlu0
    %v511 = vpop.trf.xlu0
    %v512 = vpop.trf.xlu0
    %v513 = vpop.trf.xlu0
    %v514 = vpop.trf.xlu0
    %516 = vset.pattern.permute.xlu0 16
    %517 = vperm.xlu0 %516, %v481
    %v518 = vpop.permute.xlu0 %517
    %v520 = vlaneseq
    %v521 = vshrl.u32 %v520, 7
    %v522 = vsub.s32 0, %v521
    %v523 = vrot.slane %v499, %v522
    %v524 = vadd.f32 %v518, %v523
    %v525 = vtanh.pop %v524
    %v526 = vmul.f32 %v196, %v525
    %v527 = vadd.f32 %v526, 0.0
    %528 = vset.pattern.permute.xlu0 17
    %529 = vperm.xlu0 %528, %v481
    %v530 = vpop.permute.xlu0 %529
    %v532 = vlaneseq
    %v533 = vshrl.u32 %v532, 7
    %v534 = vsub.s32 1, %v533
    %v535 = vrot.slane %v499, %v534
    %v536 = vadd.f32 %v530, %v535
    %v537 = vtanh.pop %v536
    %v538 = vmul.f32 %v209, %v537
    %v539 = vadd.f32 %v527, %v538
    %540 = vset.pattern.permute.xlu0 18
    %541 = vperm.xlu0 %540, %v481
    %v542 = vpop.permute.xlu0 %541
    %v544 = vlaneseq
    %v545 = vshrl.u32 %v544, 7
    %v546 = vsub.s32 2, %v545
    %v547 = vrot.slane %v499, %v546
    %v548 = vadd.f32 %v542, %v547
    %v549 = vtanh.pop %v548
    %v550 = vmul.f32 %v222, %v549
    %v551 = vadd.f32 %v539, %v550
    %552 = vset.pattern.permute.xlu0 19
    %553 = vperm.xlu0 %552, %v481
    %v554 = vpop.permute.xlu0 %553
    %v556 = vlaneseq
    %v557 = vshrl.u32 %v556, 7
    %v558 = vsub.s32 3, %v557
    %v559 = vrot.slane %v499, %v558
    %v560 = vadd.f32 %v554, %v559
    %v561 = vtanh.pop %v560
    %v562 = vmul.f32 %v235, %v561
    %v563 = vadd.f32 %v551, %v562
    %564 = vset.pattern.permute.xlu0 20
    %565 = vperm.xlu0 %564, %v481
    %v566 = vpop.permute.xlu0 %565
    %v568 = vlaneseq
    %v569 = vshrl.u32 %v568, 7
    %v570 = vsub.s32 4, %v569
    %v571 = vrot.slane %v499, %v570
    %v572 = vadd.f32 %v566, %v571
    %v573 = vtanh.pop %v572
    %v574 = vmul.f32 %v248, %v573
    %v575 = vadd.f32 %v563, %v574
    %576 = vset.pattern.permute.xlu0 21
    %577 = vperm.xlu0 %576, %v481
    %v578 = vpop.permute.xlu0 %577
    %v580 = vlaneseq
    %v581 = vshrl.u32 %v580, 7
    %v582 = vsub.s32 5, %v581
    %v583 = vrot.slane %v499, %v582
    %v584 = vadd.f32 %v578, %v583
    %v585 = vtanh.pop %v584
    %v586 = vmul.f32 %v261, %v585
    %v587 = vadd.f32 %v575, %v586
    %588 = vset.pattern.permute.xlu0 22
    %589 = vperm.xlu0 %588, %v481
    %v590 = vpop.permute.xlu0 %589
    %v592 = vlaneseq
    %v593 = vshrl.u32 %v592, 7
    %v594 = vsub.s32 6, %v593
    %v595 = vrot.slane %v499, %v594
    %v596 = vadd.f32 %v590, %v595
    %v597 = vtanh.pop %v596
    %v598 = vmul.f32 %v274, %v597
    %v599 = vadd.f32 %v587, %v598
    %600 = vset.pattern.permute.xlu0 23
    %601 = vperm.xlu0 %600, %v481
    %v602 = vpop.permute.xlu0 %601
    %v604 = vlaneseq
    %v605 = vshrl.u32 %v604, 7
    %v606 = vsub.s32 7, %v605
    %v607 = vrot.slane %v499, %v606
    %v608 = vadd.f32 %v602, %v607
    %v609 = vtanh.pop %v608
    %v610 = vmul.f32 %v287, %v609
    %v611 = vadd.f32 %v599, %v610
    %612 = vset.pattern.permute.xlu0 24
    %613 = vperm.xlu0 %612, %v481
    %v614 = vpop.permute.xlu0 %613
    %v616 = vlaneseq
    %v617 = vshrl.u32 %v616, 7
    %v618 = vsub.s32 0, %v617
    %v619 = vrot.slane %v500, %v618
    %v620 = vadd.f32 %v614, %v619
    %v621 = vtanh.pop %v620
    %v622 = vmul.f32 %v300, %v621
    %v623 = vadd.f32 %v611, %v622
    %624 = vset.pattern.permute.xlu0 25
    %625 = vperm.xlu0 %624, %v481
    %v626 = vpop.permute.xlu0 %625
    %v628 = vlaneseq
    %v629 = vshrl.u32 %v628, 7
    %v630 = vsub.s32 1, %v629
    %v631 = vrot.slane %v500, %v630
    %v632 = vadd.f32 %v626, %v631
    %v633 = vtanh.pop %v632
    %v634 = vmul.f32 %v313, %v633
    %v635 = vadd.f32 %v623, %v634
    %636 = vset.pattern.permute.xlu0 26
    %637 = vperm.xlu0 %636, %v481
    %v638 = vpop.permute.xlu0 %637
    %v640 = vlaneseq
    %v641 = vshrl.u32 %v640, 7
    %v642 = vsub.s32 2, %v641
    %v643 = vrot.slane %v500, %v642
    %v644 = vadd.f32 %v638, %v643
    %v645 = vtanh.pop %v644
    %v646 = vmul.f32 %v326, %v645
    %v647 = vadd.f32 %v635, %v646
    %648 = vset.pattern.permute.xlu0 27
    %649 = vperm.xlu0 %648, %v481
    %v650 = vpop.permute.xlu0 %649
    %v652 = vlaneseq
    %v653 = vshrl.u32 %v652, 7
    %v654 = vsub.s32 3, %v653
    %v655 = vrot.slane %v500, %v654
    %v656 = vadd.f32 %v650, %v655
    %v657 = vtanh.pop %v656
    %v658 = vmul.f32 %v339, %v657
    %v659 = vadd.f32 %v647, %v658
    %660 = vset.pattern.permute.xlu0 28
    %661 = vperm.xlu0 %660, %v481
    %v662 = vpop.permute.xlu0 %661
    %v664 = vlaneseq
    %v665 = vshrl.u32 %v664, 7
    %v666 = vsub.s32 4, %v665
    %v667 = vrot.slane %v500, %v666
    %v668 = vadd.f32 %v662, %v667
    %v669 = vtanh.pop %v668
    %v670 = vmul.f32 %v352, %v669
    %v671 = vadd.f32 %v659, %v670
    %672 = vset.pattern.permute.xlu0 29
    %673 = vperm.xlu0 %672, %v481
    %v674 = vpop.permute.xlu0 %673
    %v676 = vlaneseq
    %v677 = vshrl.u32 %v676, 7
    %v678 = vsub.s32 5, %v677
    %v679 = vrot.slane %v500, %v678
    %v680 = vadd.f32 %v674, %v679
    %v681 = vtanh.pop %v680
    %v682 = vmul.f32 %v365, %v681
    %v683 = vadd.f32 %v671, %v682
    %684 = vset.pattern.permute.xlu0 30
    %685 = vperm.xlu0 %684, %v481
    %v686 = vpop.permute.xlu0 %685
    %v688 = vlaneseq
    %v689 = vshrl.u32 %v688, 7
    %v690 = vsub.s32 6, %v689
    %v691 = vrot.slane %v500, %v690
    %v692 = vadd.f32 %v686, %v691
    %v693 = vtanh.pop %v692
    %v694 = vmul.f32 %v378, %v693
    %v695 = vadd.f32 %v683, %v694
    %696 = vset.pattern.permute.xlu0 31
    %697 = vperm.xlu0 %696, %v481
    %v698 = vpop.permute.xlu0 %697
    %v700 = vlaneseq
    %v701 = vshrl.u32 %v700, 7
    %v702 = vsub.s32 7, %v701
    %v703 = vrot.slane %v500, %v702
    %v704 = vadd.f32 %v698, %v703
    %v705 = vtanh.pop %v704
    %v706 = vmul.f32 %v391, %v705
    %v707 = vadd.f32 %v695, %v706
    %v708 = vsel %vm150, -inf, %v707
    %v709 = vsel %vm395, %v708, -inf
    %710 = vmax.xlane.f32.xlu0 %v709
    %v711 = vpop.xlane.xlu0 %710
    %v712 = vsub.f32 %v708, %v711
    %v713 = vmul.f32 %v712, 1.442695
    %v714 = vpow.pop %v713
    %v715 = vsel %vm395, %v714, 0.0
    %716 = vadd.xlane.f32.xlu0 %v715
    %v717 = vpop.xlane.xlu0 %716
    %v718 = vrcp.pop %v717
    %v719 = vmul.f32 %v714, %v718
    %v721 = vsel %vm395, %v719, 0
    %723 = vmatprep.subr.mxu0 0.0
    %724 = vmatpush1.msra.mxu0 %v482
    %725 = vmatprep.subr.mxu0 0.0
    %726 = vmatpush1.msra.mxu0 0.0
    %727 = vmatprep.subr.mxu0 0.0
    %728 = vmatpush1.msra.mxu0 0.0
    %729 = vmatprep.subr.mxu0 0.0
    %730 = vmatpush1.msra.mxu0 0.0
    %731 = vmatprep.subr.mxu0 0.0
    %732 = vmatpush1.msra.mxu0 0.0
    %733 = vmatprep.subr.mxu0 0.0
    %734 = vmatpush1.msra.mxu0 0.0
    %735 = vmatprep.subr.mxu0 0.0
    %736 = vmatpush1.msra.mxu0 0.0
    %737 = vmatprep.subr.mxu0 0.0
    %738 = vmatpush1.msra.mxu0 0.0
    %739 = vmatprep.subr.mxu0 0.0
    %740 = vmatpush1.msra.mxu0 0.0
    %741 = vmatprep.subr.mxu0 0.0
    %742 = vmatpush1.msra.mxu0 0.0
    %743 = vmatprep.subr.mxu0 0.0
    %744 = vmatpush1.msra.mxu0 0.0
    %745 = vmatprep.subr.mxu0 0.0
    %746 = vmatpush1.msra.mxu0 0.0
    %747 = vmatprep.subr.mxu0 0.0
    %748 = vmatpush1.msra.mxu0 0.0
    %749 = vmatprep.subr.mxu0 0.0
    %750 = vmatpush1.msra.mxu0 0.0
    %751 = vmatprep.subr.mxu0 0.0
    %752 = vmatpush1.msra.mxu0 0.0
    %753 = vmatprep.subr.mxu0 0.0
    %754 = vmatpush1.msra.mxu0 0.0
    %755 = vmatprep.subr.mxu0 0.0
    %756 = vmatpush1.msra.mxu0 0.0
    %757 = vmatprep.subr.mxu0 0.0
    %758 = vmatpush1.msra.mxu0 0.0
    %759 = vmatprep.subr.mxu0 0.0
    %760 = vmatpush1.msra.mxu0 0.0
    %761 = vmatprep.subr.mxu0 0.0
    %762 = vmatpush1.msra.mxu0 0.0
    %763 = vmatprep.subr.mxu0 0.0
    %764 = vmatpush1.msra.mxu0 0.0
    %765 = vmatprep.subr.mxu0 0.0
    %766 = vmatpush1.msra.mxu0 0.0
    %767 = vmatprep.subr.mxu0 0.0
    %768 = vmatpush1.msra.mxu0 0.0
    %769 = vmatprep.subr.mxu0 0.0
    %770 = vmatpush1.msra.mxu0 0.0
    %771 = vmatprep.subr.mxu0 0.0
    %772 = vmatpush1.msra.mxu0 0.0
    %773 = vmatprep.subr.mxu0 0.0
    %774 = vmatpush1.msra.mxu0 0.0
    %775 = vmatprep.subr.mxu0 0.0
    %776 = vmatpush1.msra.mxu0 0.0
    %777 = vmatprep.subr.mxu0 0.0
    %778 = vmatpush1.msra.mxu0 0.0
    %779 = vmatprep.subr.mxu0 0.0
    %780 = vmatpush1.msra.mxu0 0.0
    %781 = vmatprep.subr.mxu0 0.0
    %782 = vmatpush1.msra.mxu0 0.0
    %783 = vmatprep.subr.mxu0 0.0
    %784 = vmatpush1.msra.mxu0 0.0
    %785 = vmatprep.subr.mxu0 0.0
    %786 = vmatpush1.msra.mxu0 0.0
    %787 = vmatprep.mubr.f32.mxu0 0.0
    %788 = vmatmul.mubr.f32.gmra.mrb[0].mxu0 %v721
    %v789 = vpop.f32.mrb[0].mxu0
    %v790 = vadd.f32 0.0, %v789
    %v791 = vpop.f32.mrb[0].mxu0
    %792 = vdwg.mxu0
    %793 = vst [vmem:[#allocation2 + $0x8] sm:$0xff] %v790
    %v794 = vld [vmem:[#allocation2] sm:$0xff]
    %v795 = vld [vmem:[#allocation2 + $0x8] sm:$0xff]
    %v796 = vld [vmem:[%s3] sm:$0xff]
    %v797 = vld [vmem:[%s3 + $0x8] sm:$0xff]
    %v798 = vld [vmem:[%s3 + $0x10] sm:$0xff]
    %v799 = vld [vmem:[%s3 + $0x18] sm:$0xff]
    %v800 = vld [vmem:[%s3 + $0x20] sm:$0xff]
    %v801 = vld [vmem:[%s3 + $0x28] sm:$0xff]
    %v802 = vld [vmem:[%s3 + $0x30] sm:$0xff]
    %v803 = vld [vmem:[%s3 + $0x38] sm:$0xff]
    %v804 = vld [vmem:[%s3 + $0x40] sm:$0xff]
    %v805 = vld [vmem:[%s3 + $0x48] sm:$0xff]
    %v806 = vld [vmem:[%s3 + $0x50] sm:$0xff]
    %v807 = vld [vmem:[%s3 + $0x58] sm:$0xff]
    %v808 = vld [vmem:[%s3 + $0x60] sm:$0xff]
    %v809 = vld [vmem:[%s3 + $0x68] sm:$0xff]
    %v810 = vld [vmem:[%s3 + $0x70] sm:$0xff]
    %v811 = vld [vmem:[%s3 + $0x78] sm:$0xff]
    %v812 = vld [vmem:[%s4] sm:$0x1]
    %v814 = vlaneseq
    %v815 = vshrl.u32 %v814, 7
    %v816 = vsub.s32 0, %v815
    %v817 = vrot.slane %v812, %v816
    %819 = vmatprep.subr.mxu0 0.0
    %820 = vmatpush1.msra.mxu0 %v796
    %821 = vmatprep.subr.mxu0 0.0
    %822 = vmatpush1.msra.mxu0 %v797
    %823 = vmatprep.subr.mxu0 0.0
    %824 = vmatpush1.msra.mxu0 %v798
    %825 = vmatprep.subr.mxu0 0.0
    %826 = vmatpush1.msra.mxu0 %v799
    %827 = vmatprep.subr.mxu0 0.0
    %828 = vmatpush1.msra.mxu0 %v800
    %829 = vmatprep.subr.mxu0 0.0
    %830 = vmatpush1.msra.mxu0 %v801
    %831 = vmatprep.subr.mxu0 0.0
    %832 = vmatpush1.msra.mxu0 %v802
    %833 = vmatprep.subr.mxu0 0.0
    %834 = vmatpush1.msra.mxu0 %v803
    %835 = vmatprep.subr.mxu0 0.0
    %836 = vmatpush1.msra.mxu0 %v804
    %837 = vmatprep.subr.mxu0 0.0
    %838 = vmatpush1.msra.mxu0 %v805
    %839 = vmatprep.subr.mxu0 0.0
    %840 = vmatpush1.msra.mxu0 %v806
    %841 = vmatprep.subr.mxu0 0.0
    %842 = vmatpush1.msra.mxu0 %v807
    %843 = vmatprep.subr.mxu0 0.0
    %844 = vmatpush1.msra.mxu0 %v808
    %845 = vmatprep.subr.mxu0 0.0
    %846 = vmatpush1.msra.mxu0 %v809
    %847 = vmatprep.subr.mxu0 0.0
    %848 = vmatpush1.msra.mxu0 %v810
    %849 = vmatprep.subr.mxu0 0.0
    %850 = vmatpush1.msra.mxu0 %v811
    %851 = vmatprep.subr.mxu0 0.0
    %852 = vmatpush1.msra.mxu0 0.0
    %853 = vmatprep.subr.mxu0 0.0
    %854 = vmatpush1.msra.mxu0 0.0
    %855 = vmatprep.subr.mxu0 0.0
    %856 = vmatpush1.msra.mxu0 0.0
    %857 = vmatprep.subr.mxu0 0.0
    %858 = vmatpush1.msra.mxu0 0.0
    %859 = vmatprep.subr.mxu0 0.0
    %860 = vmatpush1.msra.mxu0 0.0
    %861 = vmatprep.subr.mxu0 0.0
    %862 = vmatpush1.msra.mxu0 0.0
    %863 = vmatprep.subr.mxu0 0.0
    %864 = vmatpush1.msra.mxu0 0.0
    %865 = vmatprep.subr.mxu0 0.0
    %866 = vmatpush1.msra.mxu0 0.0
    %867 = vmatprep.subr.mxu0 0.0
    %868 = vmatpush1.msra.mxu0 0.0
    %869 = vmatprep.subr.mxu0 0.0
    %870 = vmatpush1.msra.mxu0 0.0
    %871 = vmatprep.subr.mxu0 0.0
    %872 = vmatpush1.msra.mxu0 0.0
    %873 = vmatprep.subr.mxu0 0.0
    %874 = vmatpush1.msra.mxu0 0.0
    %875 = vmatprep.subr.mxu0 0.0
    %876 = vmatpush1.msra.mxu0 0.0
    %877 = vmatprep.subr.mxu0 0.0
    %878 = vmatpush1.msra.mxu0 0.0
    %879 = vmatprep.subr.mxu0 0.0
    %880 = vmatpush1.msra.mxu0 0.0
    %881 = vmatprep.subr.mxu0 0.0
    %882 = vmatpush1.msra.mxu0 0.0
    %883 = vmatprep.mubr.f32.mxu0 0.0
    %884 = vmatmul.mubr.f32.gmra.mrb[0].mxu0 %v794
    %v885 = vpop.f32.mrb[0].mxu0
    %v886 = vadd.f32 %v817, %v885
    %v887 = vpop.f32.mrb[0].mxu0
    %888 = vmatprep.mubr.f32.mxu0 0.0
    %889 = vmatmul.mubr.f32.gmra.mrb[0].mxu0 %v795
    %v890 = vpop.f32.mrb[0].mxu0
    %v891 = vadd.f32 %v817, %v890
    %v892 = vpop.f32.mrb[0].mxu0
    %893 = vdwg.mxu0
    %v894 = vmax.f32 %v886, 0.0
    %v895 = vmax.f32 %v891, 0.0
    %v896 = vld [vmem:[%s0] sm:$0xff]
    %v897 = vld [vmem:[%s0 + $0x8] sm:$0xff]
    %v898 = vadd.f32 %v896, %v894
    %v899 = vadd.f32 %v897, %v895
    %900 = vst [vmem:[#allocation7] sm:$0xff] %v898
    %901 = vst [vmem:[#allocation7 + $0x8] sm:$0xff] %v899
    // Predicated region
    $region26: #{tpu_custom_call.1} parent=1 // pred_check
      _
    $region27: #{tpu_custom_call.1} parent=1 // pred_check_branch
      %903 = sbr.rel (0) target = $region29
    $region28: #{tpu_custom_call.1} parent=1 // pred_region
      %s905 = ssub.s32 256, 256
      %906 = vsyncadd [#allocation5], %s905
      %s907 = sshll.u32 [#allocation7], 4
      %s908 = int_to_ptr.vmem [resolvable:$true] %s907
      %913 = dma.vmem_to_hbm [thread:$0]  %s908, 256, %s5, [#allocation5], 128, 128, 8
    $region29: #{tpu_custom_call.1} parent=1 // pred_fallthru
      _
    // Predicated region
    $region30: #{tpu_custom_call.1} parent=1 // pred_check
      _
    $region31: #{tpu_custom_call.1} parent=1 // pred_check_branch
      %915 = sbr.rel (0) target = $region33
    $region32: #{tpu_custom_call.1} parent=1 // pred_region
      %916 = dma.done [#allocation5], 256
    $region33: #{tpu_custom_call.1} parent=1 // pred_fallthru
      _
    %917 = vsyncpa [#allocation5], 1
    %918 = vsyncpa [#allocation6], 1

</llo_original>
